<compile_context>
chip_gen: v7x
topology: tpu7x:2x2x1
jax: 0.10.0
libtpu: 0.0.40
codegen_flags: <defaults>
</compile_context>

<pallas_src>
import math

import jax
import jax.numpy as jnp
import numpy as np
from jax.experimental import pallas as pl
from jax.experimental.pallas import tpu as pltpu


# ----------------------------------------------------------------------------- config
class EDict(dict):
    """Minimal attribute-dict (stand-in for easydict.edict)."""
    __getattr__ = dict.__getitem__
    __setattr__ = dict.__setitem__


def make_opt():
    opt = EDict()
    opt.arch = EDict(
        layers_level=[None, 32, 32, 1],     # implicit SDF/level MLP widths
        layers_rgb=[None, 32, 3],           # implicit RGB MLP widths
        layers_hyper=[None, 32, None],      # hyper-MLP widths (Linear->ReLU->Linear)
        latent_dim_sdf=64,
        latent_dim_rgb=64,
        interm_coord=True,
        shape_condition=True,
    )
    opt.impl = EDict(
        posenc_level=2,
        posenc_rgb=0,
        render_layer=0,
    )
    return opt


def get_layer_dims(layers):
    # util_run.get_layer_dims: consecutive (k_in, k_out) pairs
    return list(zip(layers[:-1], layers[1:]))


def point_dims(opt):
    point_dim_level = 3 + (opt.impl.posenc_level * 6 if opt.impl.posenc_level else 0)
    point_dim_rgb = 3 + (opt.impl.posenc_rgb * 6 if opt.impl.posenc_rgb else 0) + (
        opt.arch.layers_level[-2 - opt.impl.render_layer] if opt.arch.shape_condition else 0
    )
    return point_dim_level, point_dim_rgb


def _round_up(x, m):
    return ((x + m - 1) // m) * m


# ----------------------------------------------------------------------------- pallas kernel
def _fused_hyper_kernel(lat_ref, w1_ref, b1_ref, w2_ref, b2_ref, out_ref):
    """All hyper-layers of both branches in two bf16 MXU matmuls.

      lat_ref : (tile_rows, d_cat)           bf16  [latent_sdf | latent_rgb | 0-pad]
      w1_ref  : (d_cat, hidden*n_layers)     bf16  branch-selecting first Linears
      b1_ref  : (1, hidden*n_layers)         bf16
      w2_ref  : (hidden*n_layers, total_pad) bf16  block-diagonal second Linears
      b2_ref  : (1, total_pad)               bf16  (zero on padded lanes)
      out_ref : (tile_rows, total_pad)       f32   lane-dense output slab
    """
    # Stage 1: every layer's first Linear (one MXU matmul) + ReLU (VPU).
    h = jnp.dot(lat_ref[...], w1_ref[...], preferred_element_type=jnp.float32)
    h = jnp.maximum(h + b1_ref[...].astype(jnp.float32), 0.0)
    # Stage 2: block-diagonal second Linear -> one matmul, one contiguous 128-aligned
    # unmasked store covering every layer's output segment.
    y = jnp.dot(h.astype(jnp.bfloat16), w2_ref[...], preferred_element_type=jnp.float32)
    out_ref[...] = (y + b2_ref[...].astype(jnp.float32)).astype(out_ref.dtype)


# ----------------------------------------------------------------------------- HyperNet
class HyperNet:
    # Row tile cap for the grid (multiple of 8).  256 keeps the double-buffered
    # output slab + resident weights well inside v5e's 16 MiB scoped-VMEM default and
    # v7x's 64 MiB physical VMEM; raise to 512/1024 on v7x/v6e if batch gets large.
    ROW_TILE = 256

    def __init__(self, opt, key):
        self.opt = opt
        self.define_network(opt, key)
        self._build_fused(opt)
        # Single jitted forward: one dispatch for the fused pallas_call plus the
        # (XLA-fused) trim / reshape / weight-bias split.
        self._forward_jit = jax.jit(self._forward_impl)

    # -------------------------------------------------------------- parameters
    def define_network(self, opt, key):
        point_dim_level, point_dim_rgb = point_dims(opt)
        key_l, key_r = jax.random.split(key)
        self.hyper_level = self.get_module_params(
            opt, opt.arch.layers_level, k0=point_dim_level, branch="sdf",
            interm_coord=opt.arch.interm_coord, key=key_l)
        self.hyper_rgb = self.get_module_params(
            opt, opt.arch.layers_rgb, k0=point_dim_rgb, branch="rgb",
            interm_coord=opt.arch.interm_coord, key=key_r)

    def get_module_params(self, opt, layers, k0, branch, interm_coord, key):
        impl_params = []
        L = get_layer_dims(layers)
        keys = jax.random.split(key, len(L))
        for li, (k_in, k_out) in enumerate(L):
            if li == 0:
                k_in = k0
            if interm_coord and li > 0 and (li < len(L) - 1):
                k_in += k0
            params = self.define_hyperlayer(opt, dim_in=k_in, dim_out=k_out,
                                            branch=branch, key=keys[li])
            impl_params.append(params)
        return impl_params

    def define_hyperlayer(self, opt, dim_in, dim_out, branch, key):
        L = get_layer_dims(opt.arch.layers_hyper)
        hyperlayer = []
        keys = jax.random.split(key, len(L))
        for li, (k_in, k_out) in enumerate(L):
            if li == 0:
                k_in = opt.arch["latent_dim_" + branch]
            if li == len(L) - 1:
                k_out = (dim_in + 1) * dim_out
            # deterministic init (matches nn.Linear's U(-1/sqrt(fan_in), 1/sqrt(fan_in)))
            kw, kb = jax.random.split(keys[li])
            bound = 1.0 / math.sqrt(k_in)
            w = jax.random.uniform(kw, (k_in, k_out), jnp.float32, -bound, bound)
            b = jax.random.uniform(kb, (1, k_out), jnp.float32, -bound, bound)
            hyperlayer.append((w, b))
        return hyperlayer

    # -------------------------------------------------------- fused param prep
    def _build_fused(self, opt):
        point_dim_level, point_dim_rgb = point_dims(opt)
        hidden = opt.arch.layers_hyper[1]
        d_sdf = opt.arch.latent_dim_sdf
        d_rgb = opt.arch.latent_dim_rgb
        d_cat = _round_up(d_sdf + d_rgb, 128)       # lane-dense lhs width

        # Layer metadata in fused order: all "level" layers, then all "rgb" layers.
        metas = []  # (branch, k_in, k_out)

        def add_branch(layers, k0, branch):
            L = get_layer_dims(layers)
            for li, (k_in, k_out) in enumerate(L):
                if li == 0:
                    k_in = k0
                if opt.arch.interm_coord and li > 0 and (li < len(L) - 1):
                    k_in += k0
                metas.append((branch, k_in, k_out))

        add_branch(opt.arch.layers_level, point_dim_level, "level")
        add_branch(opt.arch.layers_rgb, point_dim_rgb, "rgb")

        params_in_order = list(self.hyper_level) + list(self.hyper_rgb)
        assert len(params_in_order) == len(metas)
        # The fused kernel assumes Linear -> ReLU -> Linear hyper-MLPs (2 Linears).
        assert all(len(p) == 2 for p in params_in_order)

        n = len(metas)
        out_dims, out_pads, out_offs = [], [], []
        off = 0
        for (_branch, k_in, k_out) in metas:
            d = (k_in + 1) * k_out
            p = _round_up(d, 128)                   # lane-dense output segment
            out_dims.append(d)
            out_pads.append(p)
            out_offs.append(off)
            off += p
        total_pad = off

        # Host-side one-time assembly of the fused bf16 parameter buffers.
        w1_sel = np.zeros((d_cat, hidden * n), np.float32)   # branch-selecting W1
        b1_cat = np.zeros((1, hidden * n), np.float32)
        w2_bd = np.zeros((hidden * n, total_pad), np.float32)  # block-diagonal W2
        b2_cat = np.zeros((1, total_pad), np.float32)
        for li, ((branch, _k_in, _k_out), ((w1, b1), (w2, b2))) in enumerate(
                zip(metas, params_in_order)):
            r0 = 0 if branch == "level" else d_sdf   # which latent columns this layer reads
            d_lat = w1.shape[0]
            w1_sel[r0:r0 + d_lat, li * hidden:(li + 1) * hidden] = np.asarray(w1)
            b1_cat[:, li * hidden:(li + 1) * hidden] = np.asarray(b1)
            d = out_dims[li]
            w2_bd[li * hidden:(li + 1) * hidden,
                  out_offs[li]:out_offs[li] + d] = np.asarray(w2)
            b2_cat[:, out_offs[li]:out_offs[li] + d] = np.asarray(b2)

        self._metas = metas
        self._hidden = hidden
        self._d_sdf, self._d_rgb, self._d_cat = d_sdf, d_rgb, d_cat
        self._out_dims = out_dims
        self._out_pads = out_pads
        self._out_offs = out_offs
        self._total_pad = total_pad

        self._fused_params = {
            "w1": jnp.asarray(w1_sel, jnp.bfloat16),   # (d_cat, hidden*n)
            "b1": jnp.asarray(b1_cat, jnp.bfloat16),   # (1, hidden*n)
            "w2": jnp.asarray(w2_bd, jnp.bfloat16),    # (hidden*n, total_pad)
            "b2": jnp.asarray(b2_cat, jnp.bfloat16),   # (1, total_pad)
        }

    # ----------------------------------------------------------- fused forward
    def _fused_pallas(self, lat_cat, fused):
        rows, d_cat = lat_cat.shape
        tile = rows if rows <= self.ROW_TILE else self.ROW_TILE
        assert rows % tile == 0 and rows % 8 == 0
        grid = (rows // tile,)

        hn = fused["w1"].shape[1]
        flops = 2 * rows * (d_cat * hn + hn * self._total_pad)
        bytes_accessed = (
            lat_cat.size * lat_cat.dtype.itemsize
            + sum(int(v.size) * v.dtype.itemsize for v in fused.values())
            + rows * self._total_pad * 4
        )

        return pl.pallas_call(
            _fused_hyper_kernel,
            out_shape=jax.ShapeDtypeStruct((rows, self._total_pad), jnp.float32),
            grid_spec=pltpu.PrefetchScalarGridSpec(
                num_scalar_prefetch=0,
                grid=grid,
                in_specs=[
                    pl.BlockSpec((tile, d_cat), lambda i: (i, 0)),
                    # weights/biases: constant index_map -> resident across row tiles
                    pl.BlockSpec(fused["w1"].shape, lambda i: (0, 0)),
                    pl.BlockSpec(fused["b1"].shape, lambda i: (0, 0)),
                    pl.BlockSpec(fused["w2"].shape, lambda i: (0, 0)),
                    pl.BlockSpec(fused["b2"].shape, lambda i: (0, 0)),
                ],
                out_specs=pl.BlockSpec((tile, self._total_pad), lambda i: (i, 0)),
            ),
            compiler_params=pltpu.CompilerParams(
                dimension_semantics=("parallel",)),
            cost_estimate=pl.CostEstimate(
                flops=int(flops), transcendentals=0,
                bytes_accessed=int(bytes_accessed)),
        )(lat_cat, fused["w1"], fused["b1"], fused["w2"], fused["b2"])

    def _forward_impl(self, fused, latent_sdf, latent_rgb):
        B = latent_sdf.shape[0]
        rows = _round_up(max(B, 1), 8)              # full f32 sublane tiles
        if rows > self.ROW_TILE:
            rows = _round_up(rows, self.ROW_TILE)   # whole row tiles when gridded

        # Column-stack both branches' latents (bf16) into one lane-dense lhs; padded
        # rows/columns hit zero W1 rows, so they only produce discarded bias outputs.
        lat = jnp.zeros((rows, self._d_cat), jnp.bfloat16)
        lat = lat.at[:B, :self._d_sdf].set(latent_sdf.astype(jnp.bfloat16))
        lat = lat.at[:B, self._d_sdf:self._d_sdf + self._d_rgb].set(
            latent_rgb.astype(jnp.bfloat16))

        slab = self._fused_pallas(lat, fused)       # (rows, total_pad) f32

        # Trim / reshape / weight-bias split — fused by XLA under the same jit.
        out = {"level": [], "rgb": []}
        for (branch, k_in, k_out), off in zip(self._metas, self._out_offs):
            seg = slab[:B, off:off + (k_in + 1) * k_out]
            o3 = seg.reshape(B, k_in + 1, k_out)
            out[branch].append([o3[:, 1:], o3[:, :1]])   # [weight, bias]
        return out

    def forward(self, latent_sdf, latent_rgb):
        out = self._forward_jit(self._fused_params, latent_sdf, latent_rgb)
        return EDict(out)

    # --------------------------------------------------- pure-JAX reference path
    @staticmethod
    def _hyper_mlp_ref(latent, params):
        x = latent
        for li, (w, b) in enumerate(params):
            x = x @ w + b
            if li != len(params) - 1:
                x = jnp.maximum(x, 0.0)
        return x

    def forward_ref(self, latent_sdf, latent_rgb):
        opt = self.opt
        point_dim_level, point_dim_rgb = point_dims(opt)
        out = EDict()
        out.level = self._hl_fwd_ref(latent_sdf, self.hyper_level, opt.arch.layers_level,
                                     point_dim_level, opt.arch.interm_coord)
        out.rgb = self._hl_fwd_ref(latent_rgb, self.hyper_rgb, opt.arch.layers_rgb,
                                   point_dim_rgb, opt.arch.interm_coord)
        return out

    def _hl_fwd_ref(self, latent, module, layers, k0, interm_coord):
        batch_size = latent.shape[0]
        impl_layers = []
        L = get_layer_dims(layers)
        for li, (k_in, k_out) in enumerate(L):
            if li == 0:
                k_in = k0
            if interm_coord and li > 0 and (li < len(L) - 1):
                k_in += k0
            feat = self._hyper_mlp_ref(latent, module[li])
            out3 = feat.reshape(batch_size, k_in + 1, k_out)
            impl_layers.append([out3[:, 1:], out3[:, :1]])
        return impl_layers


# ----------------------------------------------------------------------------- main
if __name__ == "__main__":
    opt = make_opt()
    key = jax.random.PRNGKey(0)
    key_net, key_sdf, key_rgb = jax.random.split(key, 3)

    net = HyperNet(opt, key_net)

    batch = 2
    latent_sdf = jax.random.normal(key_sdf, (batch, opt.arch.latent_dim_sdf), jnp.float32)
    latent_rgb = jax.random.normal(key_rgb, (batch, opt.arch.latent_dim_rgb), jnp.float32)

    impl_weights = net.forward(latent_sdf, latent_rgb)
    jax.block_until_ready(jax.tree_util.tree_leaves(dict(impl_weights)))

    # numerical check vs pure-JAX f32 reference (tolerance covers the kernel's bf16
    # parameter / latent cast and the reference path's default-precision matmuls)
    ref = net.forward_ref(latent_sdf, latent_rgb)
    for branch in ("level", "rgb"):
        for (w_k, b_k), (w_r, b_r) in zip(impl_weights[branch], ref[branch]):
            np.testing.assert_allclose(np.asarray(w_k), np.asarray(w_r), rtol=2e-2, atol=2e-2)
            np.testing.assert_allclose(np.asarray(b_k), np.asarray(b_r), rtol=2e-2, atol=2e-2)

    print("KERNEL_OK")
</pallas_src>

<mosaic_0001>
module attributes {stable_mosaic.version = 11 : i64} {
  func.func @_fused_hyper_kernel(%arg0: i32, %arg1: memref<8x128xbf16, #tpu.memory_space<vmem>>, %arg2: memref<128x160xbf16, #tpu.memory_space<vmem>>, %arg3: memref<1x160xbf16, #tpu.memory_space<vmem>>, %arg4: memref<160x3456xbf16, #tpu.memory_space<vmem>>, %arg5: memref<1x3456xbf16, #tpu.memory_space<vmem>>, %arg6: memref<8x3456xf32, #tpu.memory_space<vmem>>) attributes {dimension_semantics = [#tpu.dimension_semantics<parallel>], iteration_bounds = array<i64: 1>, scalar_prefetch = 0 : i64, scratch_operands = 0 : i64, tpu.core_type = #tpu.core_type<tc>, window_params = [{transform_indices = @transform_0, window_bounds = array<i64: 8, 128>}, {pipeline_mode = #tpu.pipeline_mode<synchronous>, transform_indices = @transform_1, window_bounds = array<i64: 128, 160>}, {pipeline_mode = #tpu.pipeline_mode<synchronous>, transform_indices = @transform_2, window_bounds = array<i64: 1, 160>}, {pipeline_mode = #tpu.pipeline_mode<synchronous>, transform_indices = @transform_3, window_bounds = array<i64: 160, 3456>}, {pipeline_mode = #tpu.pipeline_mode<synchronous>, transform_indices = @transform_4, window_bounds = array<i64: 1, 3456>}, {transform_indices = @transform_5, window_bounds = array<i64: 8, 3456>}]} {
    %c0 = arith.constant 0 : index
    %c0_0 = arith.constant 0 : index
    %0 = vector.load %arg1[%c0, %c0_0] : memref<8x128xbf16, #tpu.memory_space<vmem>>, vector<8x128xbf16>
    %c0_1 = arith.constant 0 : index
    %c0_2 = arith.constant 0 : index
    %1 = vector.load %arg2[%c0_1, %c0_2] : memref<128x160xbf16, #tpu.memory_space<vmem>>, vector<128x160xbf16>
    %cst = arith.constant dense<0.000000e+00> : vector<8x160xf32>
    %2 = tpu.matmul %0, %1, %cst {dimension_numbers = #tpu.dot_dimension_numbers<[1], [0], [0], [1], [0, 0, 1, 1], [], []>} : vector<8x128xbf16>, vector<128x160xbf16>, vector<8x160xf32> -> vector<8x160xf32>
    %c0_3 = arith.constant 0 : index
    %c0_4 = arith.constant 0 : index
    %3 = vector.load %arg3[%c0_3, %c0_4] : memref<1x160xbf16, #tpu.memory_space<vmem>>, vector<1x160xbf16>
    %4 = arith.extf %3 : vector<1x160xbf16> to vector<1x160xf32>
    %5 = vector.broadcast %4 : vector<1x160xf32> to vector<8x160xf32>
    %6 = arith.addf %2, %5 : vector<8x160xf32>
    %cst_5 = arith.constant 0.000000e+00 : f32
    %7 = vector.broadcast %cst_5 : f32 to vector<8x160xf32>
    %8 = arith.maximumf %6, %7 : vector<8x160xf32>
    %9 = arith.truncf %8 : vector<8x160xf32> to vector<8x160xbf16>
    %c0_6 = arith.constant 0 : index
    %c0_7 = arith.constant 0 : index
    %10 = vector.load %arg4[%c0_6, %c0_7] : memref<160x3456xbf16, #tpu.memory_space<vmem>>, vector<160x3456xbf16>
    %cst_8 = arith.constant dense<0.000000e+00> : vector<8x3456xf32>
    %11 = tpu.matmul %9, %10, %cst_8 {dimension_numbers = #tpu.dot_dimension_numbers<[1], [0], [0], [1], [0, 0, 1, 1], [], []>} : vector<8x160xbf16>, vector<160x3456xbf16>, vector<8x3456xf32> -> vector<8x3456xf32>
    %c0_9 = arith.constant 0 : index
    %c0_10 = arith.constant 0 : index
    %12 = vector.load %arg5[%c0_9, %c0_10] : memref<1x3456xbf16, #tpu.memory_space<vmem>>, vector<1x3456xbf16>
    %13 = arith.extf %12 : vector<1x3456xbf16> to vector<1x3456xf32>
    %14 = vector.broadcast %13 : vector<1x3456xf32> to vector<8x3456xf32>
    %15 = arith.addf %11, %14 : vector<8x3456xf32>
    %c0_11 = arith.constant 0 : index
    %c0_12 = arith.constant 0 : index
    %16 = vector.load %arg6[%c0_11, %c0_12] : memref<8x3456xf32, #tpu.memory_space<vmem>>, vector<8x3456xf32>
    tpu.vector_store %arg6[%c0_11, %c0_12], %15 {strides = array<i32>} : memref<8x3456xf32, #tpu.memory_space<vmem>>, vector<8x3456xf32>,
    return
  }
  func.func @transform_0(%arg0: i32) -> (i32, i32) {
    %c0_i32 = arith.constant 0 : i32
    %c0_i32_0 = arith.constant 0 : i32
    return %arg0, %c0_i32 : i32, i32
  }
  func.func @transform_1(%arg0: i32) -> (i32, i32) {
    %c0_i32 = arith.constant 0 : i32
    %c0_i32_0 = arith.constant 0 : i32
    %c0_i32_1 = arith.constant 0 : i32
    return %c0_i32, %c0_i32_0 : i32, i32
  }
  func.func @transform_2(%arg0: i32) -> (i32, i32) {
    %c0_i32 = arith.constant 0 : i32
    %c0_i32_0 = arith.constant 0 : i32
    %c0_i32_1 = arith.constant 0 : i32
    return %c0_i32, %c0_i32_0 : i32, i32
  }
  func.func @transform_3(%arg0: i32) -> (i32, i32) {
    %c0_i32 = arith.constant 0 : i32
    %c0_i32_0 = arith.constant 0 : i32
    %c0_i32_1 = arith.constant 0 : i32
    return %c0_i32, %c0_i32_0 : i32, i32
  }
  func.func @transform_4(%arg0: i32) -> (i32, i32) {
    %c0_i32 = arith.constant 0 : i32
    %c0_i32_0 = arith.constant 0 : i32
    %c0_i32_1 = arith.constant 0 : i32
    return %c0_i32, %c0_i32_0 : i32, i32
  }
  func.func @transform_5(%arg0: i32) -> (i32, i32) {
    %c0_i32 = arith.constant 0 : i32
    %c0_i32_0 = arith.constant 0 : i32
    return %arg0, %c0_i32 : i32, i32
  }
}

</mosaic_0001>

<llo_original>
// kernel: _forward_impl.1
$region0: #{_forward_impl.1}
  #allocation0 [shape = 'u32[]', space=smem, size = 0x4, offset = 0x4, fixed_abs, tag = 'smem constant byte address 0x4 - core index']
  #allocation1 [shape = 'u32[144,128]{1,0:T(1,128)}', space=vmem, size = 0x12000, scoped, tag = 'internal scratch']
  %s0 = inlined_call_operand.vmem [shape: bf16[8,128], index: 0, kind: input, shape index: {}]
  %s1 = inlined_call_operand.vmem [shape: bf16[128,160], index: 1, kind: input, shape index: {}]
  %s2 = inlined_call_operand.hbm [shape: bf16[1,160], index: 2, kind: input, shape index: {}]
  %s3 = inlined_call_operand.hbm [shape: bf16[160,3456], index: 3, kind: input, shape index: {}]
  %s4 = inlined_call_operand.hbm [shape: bf16[1,3456], index: 4, kind: input, shape index: {}]
  %s5 = inlined_call_operand.vmem [shape: f32[8,3456], index: 5, kind: output, shape index: {}]
  %s6 = sld [smem:[#allocation0]]
  $region42: #{_forward_impl.1} parent=0
    _
  %s8 = ssub.s32 1, %s6
  %s9 = scalar_select 0, %s8, %s6
  $region1: #{_forward_impl.1} parent=0
    #allocation2 [shape = 'u8[1024]{0}', space=vmem, size = 0x400, scoped, tag = 'input window, operand 2, single buffered']
    #allocation3 [shape = 's32[1]{0}', space=sflag, size = 0x4, scoped, tag = 'scoped memory for _forward_impl.1']
    #allocation4 [shape = 'u8[1105920]{0}', space=vmem, size = 0x10e000, scoped, tag = 'input window, operand 3, single buffered']
    #allocation5 [shape = 's32[1]{0}', space=sflag, size = 0x4, scoped, tag = 'scoped memory for _forward_impl.1']
    #allocation6 [shape = 'u8[13824]{0}', space=vmem, size = 0x3800, scoped, tag = 'input window, operand 4, single buffered']
    %10 = vsyncpa [#allocation3], 0
    %11 = vsyncpa [#allocation5], 0
    // Predicated region
    $region2: #{_forward_impl.1} parent=1 // pred_check
      _
    $region3: #{_forward_impl.1} parent=1 // pred_check_branch
      %13 = sbr.rel (0) target = $region5
    $region4: #{_forward_impl.1} parent=1 // pred_region
      _
    $region5: #{_forward_impl.1} parent=1 // pred_fallthru
      _
    // Predicated region
    $region6: #{_forward_impl.1} parent=1 // pred_check
      _
    $region7: #{_forward_impl.1} parent=1 // pred_check_branch
      %15 = sbr.rel (0) target = $region9
    $region8: #{_forward_impl.1} parent=1 // pred_region
      _
    $region9: #{_forward_impl.1} parent=1 // pred_fallthru
      _
    // Predicated region
    $region10: #{_forward_impl.1} parent=1 // pred_check
      _
    $region11: #{_forward_impl.1} parent=1 // pred_check_branch
      %17 = sbr.rel (0) target = $region13
    $region12: #{_forward_impl.1} parent=1 // pred_region
      %s19 = ssub.s32 32, 32
      %20 = vsyncadd [#allocation3], %s19
      %s22 = sshll.u32 [#allocation2], 4
      %s23 = int_to_ptr.vmem [resolvable:$true] %s22
      %25 = dma.hbm_to_vmem [thread:$0]  %s2, 32, %s23, [#allocation3]
    $region13: #{_forward_impl.1} parent=1 // pred_fallthru
      _
    // Predicated region
    $region14: #{_forward_impl.1} parent=1 // pred_check
      _
    $region15: #{_forward_impl.1} parent=1 // pred_check_branch
      %27 = sbr.rel (0) target = $region17
    $region16: #{_forward_impl.1} parent=1 // pred_region
      %s29 = ssub.s32 34560, 34560
      %30 = vsyncadd [#allocation5], %s29
      %s31 = sshll.u32 [#allocation4], 4
      %s32 = int_to_ptr.vmem [resolvable:$true] %s31
      %37 = dma.hbm_to_vmem [thread:$0]  %s3, 34560, %s32, [#allocation5], 1728, 1728, 108
    $region17: #{_forward_impl.1} parent=1 // pred_fallthru
      _
    // Predicated region
    $region18: #{_forward_impl.1} parent=1 // pred_check
      _
    $region19: #{_forward_impl.1} parent=1 // pred_check_branch
      %39 = sbr.rel (0) target = $region21
    $region20: #{_forward_impl.1} parent=1 // pred_region
      %s41 = ssub.s32 432, 432
      %42 = vsyncadd [#allocation5], %s41
      %s44 = sshll.u32 [#allocation6], 4
      %s45 = int_to_ptr.vmem [resolvable:$true] %s44
      %47 = dma.hbm_to_vmem [thread:$0]  %s4, 432, %s45, [#allocation5]
    $region21: #{_forward_impl.1} parent=1 // pred_fallthru
      _
    // Predicated region
    $region22: #{_forward_impl.1} parent=1 // pred_check
      _
    $region23: #{_forward_impl.1} parent=1 // pred_check_branch
      %49 = sbr.rel (0) target = $region25
    $region24: #{_forward_impl.1} parent=1 // pred_region
      %50 = dma.done [#allocation3], 32
    $region25: #{_forward_impl.1} parent=1 // pred_fallthru
      _
    // Predicated region
    $region26: #{_forward_impl.1} parent=1 // pred_check
      _
    $region27: #{_forward_impl.1} parent=1 // pred_check_branch
      %52 = sbr.rel (0) target = $region29
    $region28: #{_forward_impl.1} parent=1 // pred_region
      %53 = dma.done [#allocation5], 34560
    $region29: #{_forward_impl.1} parent=1 // pred_fallthru
      _
    // Predicated region
    $region30: #{_forward_impl.1} parent=1 // pred_check
      _
    $region31: #{_forward_impl.1} parent=1 // pred_check_branch
      %55 = sbr.rel (0) target = $region33
    $region32: #{_forward_impl.1} parent=1 // pred_region
      %56 = dma.done [#allocation5], 432
    $region33: #{_forward_impl.1} parent=1 // pred_fallthru
      _
    %v58 = vld [vmem:[%s0] sm:$0xf]
    %v59 = vld [vmem:[%s1] sm:$0xff]
    %v60 = vld [vmem:[%s1 + $0x8] sm:$0xff]
    %v61 = vld [vmem:[%s1 + $0x10] sm:$0xff]
    %v62 = vld [vmem:[%s1 + $0x18] sm:$0xff]
    %v63 = vld [vmem:[%s1 + $0x20] sm:$0xff]
    %v64 = vld [vmem:[%s1 + $0x28] sm:$0xff]
    %v65 = vld [vmem:[%s1 + $0x30] sm:$0xff]
    %v66 = vld [vmem:[%s1 + $0x38] sm:$0xff]
    %v67 = vld [vmem:[%s1 + $0x40] sm:$0xff]
    %v68 = vld [vmem:[%s1 + $0x48] sm:$0xff]
    %v69 = vld [vmem:[%s1 + $0x50] sm:$0xff]
    %v70 = vld [vmem:[%s1 + $0x58] sm:$0xff]
    %v71 = vld [vmem:[%s1 + $0x60] sm:$0xff]
    %v72 = vld [vmem:[%s1 + $0x68] sm:$0xff]
    %v73 = vld [vmem:[%s1 + $0x70] sm:$0xff]
    %v74 = vld [vmem:[%s1 + $0x78] sm:$0xff]
    %v75 = vld [vmem:[#allocation2] sm:$0x3]
    %v76 = vunpack.c.l.bf16 %v75
    %v78 = vlaneseq
    %v79 = vshrl.u32 %v78, 7
    %v80 = vsub.s32 0, %v79
    %v81 = vrot.slane %v76, %v80
    %v82 = vlaneseq
    %v83 = vshrl.u32 %v82, 7
    %v84 = vsub.s32 2, %v83
    %v85 = vrot.slane %v76, %v84
    %v88 = vlaneseq
    %v89 = vshrl.u32 %v88, 7
    %v90 = vsub.s32 0, %v89
    %v91 = vrot.slane %v81, %v90
    %v92 = vlaneseq
    %v93 = vshrl.u32 %v92, 7
    %v94 = vsub.s32 0, %v93
    %v95 = vrot.slane %v85, %v94
    %v112 = vunpack.c.l.b16 %v59
    %v113 = vunpack.c.h.b16 %v59
    %v114 = vunpack.c.l.b16 %v60
    %v115 = vunpack.c.h.b16 %v60
    %v116 = vunpack.c.l.b16 %v61
    %v117 = vunpack.c.h.b16 %v61
    %v118 = vunpack.c.l.b16 %v62
    %v119 = vunpack.c.h.b16 %v62
    %v120 = vunpack.c.l.b16 %v63
    %v121 = vunpack.c.h.b16 %v63
    %v122 = vunpack.c.l.b16 %v64
    %v123 = vunpack.c.h.b16 %v64
    %v124 = vunpack.c.l.b16 %v65
    %v125 = vunpack.c.h.b16 %v65
    %v126 = vunpack.c.l.b16 %v66
    %v127 = vunpack.c.h.b16 %v66
    %v128 = vunpack.c.l.b16 %v67
    %v129 = vunpack.c.h.b16 %v67
    %v130 = vunpack.c.l.b16 %v68
    %v131 = vunpack.c.h.b16 %v68
    %v132 = vunpack.c.l.b16 %v69
    %v133 = vunpack.c.h.b16 %v69
    %v134 = vunpack.c.l.b16 %v70
    %v135 = vunpack.c.h.b16 %v70
    %v136 = vunpack.c.l.b16 %v71
    %v137 = vunpack.c.h.b16 %v71
    %v138 = vunpack.c.l.b16 %v72
    %v139 = vunpack.c.h.b16 %v72
    %v140 = vunpack.c.l.b16 %v73
    %v141 = vunpack.c.h.b16 %v73
    %v142 = vunpack.c.l.b16 %v74
    %v143 = vunpack.c.h.b16 %v74
    %v144 = vpack.c.b16 %v114, %v112
    %v145 = vpack.c.b16 %v115, %v113
    %v146 = vpack.c.b16 %v118, %v116
    %v147 = vpack.c.b16 %v119, %v117
    %v148 = vpack.c.b16 %v122, %v120
    %v149 = vpack.c.b16 %v123, %v121
    %v150 = vpack.c.b16 %v126, %v124
    %v151 = vpack.c.b16 %v127, %v125
    %v152 = vpack.c.b16 %v130, %v128
    %v153 = vpack.c.b16 %v131, %v129
    %v154 = vpack.c.b16 %v134, %v132
    %v155 = vpack.c.b16 %v135, %v133
    %v156 = vpack.c.b16 %v138, %v136
    %v157 = vpack.c.b16 %v139, %v137
    %v158 = vpack.c.b16 %v142, %v140
    %v159 = vpack.c.b16 %v143, %v141
    %176 = vmatprep.subr.bf16.mxu0 %v145
    %177 = vmatpush1.bf16.msra.mxu0 %v144
    %178 = vmatprep.subr.bf16.mxu0 %v147
    %179 = vmatpush1.bf16.msra.mxu0 %v146
    %180 = vmatprep.subr.bf16.mxu0 %v149
    %181 = vmatpush1.bf16.msra.mxu0 %v148
    %182 = vmatprep.subr.bf16.mxu0 %v151
    %183 = vmatpush1.bf16.msra.mxu0 %v150
    %184 = vmatprep.subr.bf16.mxu0 %v153
    %185 = vmatpush1.bf16.msra.mxu0 %v152
    %186 = vmatprep.subr.bf16.mxu0 %v155
    %187 = vmatpush1.bf16.msra.mxu0 %v154
    %188 = vmatprep.subr.bf16.mxu0 %v157
    %189 = vmatpush1.bf16.msra.mxu0 %v156
    %190 = vmatprep.subr.bf16.mxu0 %v159
    %191 = vmatpush1.bf16.msra.mxu0 %v158
    %192 = vmatprep.subr.bf16.mxu0 0
    %193 = vmatpush1.bf16.msra.mxu0 0
    %194 = vmatprep.subr.bf16.mxu0 0
    %195 = vmatpush1.bf16.msra.mxu0 0
    %196 = vmatprep.subr.bf16.mxu0 0
    %197 = vmatpush1.bf16.msra.mxu0 0
    %198 = vmatprep.subr.bf16.mxu0 0
    %199 = vmatpush1.bf16.msra.mxu0 0
    %200 = vmatprep.subr.bf16.mxu0 0
    %201 = vmatpush1.bf16.msra.mxu0 0
    %202 = vmatprep.subr.bf16.mxu0 0
    %203 = vmatpush1.bf16.msra.mxu0 0
    %204 = vmatprep.subr.bf16.mxu0 0
    %205 = vmatpush1.bf16.msra.mxu0 0
    %206 = vmatprep.subr.bf16.mxu0 0
    %207 = vmatpush1.bf16.msra.mxu0 0
    %208 = vmatprep.mubr.bf16.mxu0 0
    %209 = vmatmul.mubr.bf16.gmra.mrb[0].mxu0 %v58
    %v210 = vpop.f32.mrb[0].mxu0
    %v211 = vadd.f32 %v91, %v210
    %v212 = vpop.f32.mrb[0].mxu0
    %v213 = vadd.f32 %v95, %v212
    %v214 = vpop.f32.mrb[0].mxu0
    %v215 = vpop.f32.mrb[0].mxu0
    %216 = vdwg.mxu0
    %v217 = vmax.f32 %v211, 0.0
    %v218 = vmax.f32 %v213, 0.0
    %v219 = vpack.c.bf16 %v217, %v217
    %v220 = vpack.c.bf16 %v218, %v218
    %v221 = vld [vmem:[#allocation4] sm:$0xff]
    %v222 = vld [vmem:[#allocation4 + $0x8] sm:$0xff]
    %v223 = vld [vmem:[#allocation4 + $0x10] sm:$0xff]
    %v224 = vld [vmem:[#allocation4 + $0x18] sm:$0xff]
    %v225 = vld [vmem:[#allocation4 + $0x20] sm:$0xff]
    %v226 = vld [vmem:[#allocation4 + $0x28] sm:$0xff]
    %v227 = vld [vmem:[#allocation4 + $0x30] sm:$0xff]
    %v228 = vld [vmem:[#allocation4 + $0x38] sm:$0xff]
    %v229 = vld [vmem:[#allocation4 + $0x40] sm:$0xff]
    %v230 = vld [vmem:[#allocation4 + $0x48] sm:$0xff]
    %v231 = vld [vmem:[#allocation4 + $0x50] sm:$0xff]
    %v232 = vld [vmem:[#allocation4 + $0x58] sm:$0xff]
    %v233 = vld [vmem:[#allocation4 + $0x60] sm:$0xff]
    %v234 = vld [vmem:[#allocation4 + $0x68] sm:$0xf]
    %v235 = vld [vmem:[#allocation4 + $0x6c] sm:$0xff]
    %v236 = vld [vmem:[#allocation4 + $0x74] sm:$0xff]
    %v237 = vld [vmem:[#allocation4 + $0x7c] sm:$0xff]
    %v238 = vld [vmem:[#allocation4 + $0x84] sm:$0xff]
    %v239 = vld [vmem:[#allocation4 + $0x8c] sm:$0xff]
    %v240 = vld [vmem:[#allocation4 + $0x94] sm:$0xff]
    %v241 = vld [vmem:[#allocation4 + $0x9c] sm:$0xff]
    %v242 = vld [vmem:[#allocation4 + $0xa4] sm:$0xff]
    %v243 = vld [vmem:[#allocation4 + $0xac] sm:$0xff]
    %v244 = vld [vmem:[#allocation4 + $0xb4] sm:$0xff]
    %v245 = vld [vmem:[#allocation4 + $0xbc] sm:$0xff]
    %v246 = vld [vmem:[#allocation4 + $0xc4] sm:$0xff]
    %v247 = vld [vmem:[#allocation4 + $0xcc] sm:$0xff]
    %v248 = vld [vmem:[#allocation4 + $0xd4] sm:$0xf]
    %v249 = vld [vmem:[#allocation4 + $0xd8] sm:$0xff]
    %v250 = vld [vmem:[#allocation4 + $0xe0] sm:$0xff]
    %v251 = vld [vmem:[#allocation4 + $0xe8] sm:$0xff]
    %v252 = vld [vmem:[#allocation4 + $0xf0] sm:$0xff]
    %v253 = vld [vmem:[#allocation4 + $0xf8] sm:$0xff]
    %v254 = vld [vmem:[#allocation4 + $0x100] sm:$0xff]
    %v255 = vld [vmem:[#allocation4 + $0x108] sm:$0xff]
    %v256 = vld [vmem:[#allocation4 + $0x110] sm:$0xff]
    %v257 = vld [vmem:[#allocation4 + $0x118] sm:$0xff]
    %v258 = vld [vmem:[#allocation4 + $0x120] sm:$0xff]
    %v259 = vld [vmem:[#allocation4 + $0x128] sm:$0xff]
    %v260 = vld [vmem:[#allocation4 + $0x130] sm:$0xff]
    %v261 = vld [vmem:[#allocation4 + $0x138] sm:$0xff]
    %v262 = vld [vmem:[#allocation4 + $0x140] sm:$0xf]
    %v263 = vld [vmem:[#allocation4 + $0x144] sm:$0xff]
    %v264 = vld [vmem:[#allocation4 + $0x14c] sm:$0xff]
    %v265 = vld [vmem:[#allocation4 + $0x154] sm:$0xff]
    %v266 = vld [vmem:[#allocation4 + $0x15c] sm:$0xff]
    %v267 = vld [vmem:[#allocation4 + $0x164] sm:$0xff]
    %v268 = vld [vmem:[#allocation4 + $0x16c] sm:$0xff]
    %v269 = vld [vmem:[#allocation4 + $0x174] sm:$0xff]
    %v270 = vld [vmem:[#allocation4 + $0x17c] sm:$0xff]
    %v271 = vld [vmem:[#allocation4 + $0x184] sm:$0xff]
    %v272 = vld [vmem:[#allocation4 + $0x18c] sm:$0xff]
    %v273 = vld [vmem:[#allocation4 + $0x194] sm:$0xff]
    %v274 = vld [vmem:[#allocation4 + $0x19c] sm:$0xff]
    %v275 = vld [vmem:[#allocation4 + $0x1a4] sm:$0xff]
    %v276 = vld [vmem:[#allocation4 + $0x1ac] sm:$0xf]
    %v277 = vld [vmem:[#allocation4 + $0x1b0] sm:$0xff]
    %v278 = vld [vmem:[#allocation4 + $0x1b8] sm:$0xff]
    %v279 = vld [vmem:[#allocation4 + $0x1c0] sm:$0xff]
    %v280 = vld [vmem:[#allocation4 + $0x1c8] sm:$0xff]
    %v281 = vld [vmem:[#allocation4 + $0x1d0] sm:$0xff]
    %v282 = vld [vmem:[#allocation4 + $0x1d8] sm:$0xff]
    %v283 = vld [vmem:[#allocation4 + $0x1e0] sm:$0xff]
    %v284 = vld [vmem:[#allocation4 + $0x1e8] sm:$0xff]
    %v285 = vld [vmem:[#allocation4 + $0x1f0] sm:$0xff]
    %v286 = vld [vmem:[#allocation4 + $0x1f8] sm:$0xff]
    %v287 = vld [vmem:[#allocation4 + $0x200] sm:$0xff]
    %v288 = vld [vmem:[#allocation4 + $0x208] sm:$0xff]
    %v289 = vld [vmem:[#allocation4 + $0x210] sm:$0xff]
    %v290 = vld [vmem:[#allocation4 + $0x218] sm:$0xf]
    %v291 = vld [vmem:[#allocation4 + $0x21c] sm:$0xff]
    %v292 = vld [vmem:[#allocation4 + $0x224] sm:$0xff]
    %v293 = vld [vmem:[#allocation4 + $0x22c] sm:$0xff]
    %v294 = vld [vmem:[#allocation4 + $0x234] sm:$0xff]
    %v295 = vld [vmem:[#allocation4 + $0x23c] sm:$0xff]
    %v296 = vld [vmem:[#allocation4 + $0x244] sm:$0xff]
    %v297 = vld [vmem:[#allocation4 + $0x24c] sm:$0xff]
    %v298 = vld [vmem:[#allocation4 + $0x254] sm:$0xff]
    %v299 = vld [vmem:[#allocation4 + $0x25c] sm:$0xff]
    %v300 = vld [vmem:[#allocation4 + $0x264] sm:$0xff]
    %v301 = vld [vmem:[#allocation4 + $0x26c] sm:$0xff]
    %v302 = vld [vmem:[#allocation4 + $0x274] sm:$0xff]
    %v303 = vld [vmem:[#allocation4 + $0x27c] sm:$0xff]
    %v304 = vld [vmem:[#allocation4 + $0x284] sm:$0xf]
    %v305 = vld [vmem:[#allocation4 + $0x288] sm:$0xff]
    %v306 = vld [vmem:[#allocation4 + $0x290] sm:$0xff]
    %v307 = vld [vmem:[#allocation4 + $0x298] sm:$0xff]
    %v308 = vld [vmem:[#allocation4 + $0x2a0] sm:$0xff]
    %v309 = vld [vmem:[#allocation4 + $0x2a8] sm:$0xff]
    %v310 = vld [vmem:[#allocation4 + $0x2b0] sm:$0xff]
    %v311 = vld [vmem:[#allocation4 + $0x2b8] sm:$0xff]
    %v312 = vld [vmem:[#allocation4 + $0x2c0] sm:$0xff]
    %v313 = vld [vmem:[#allocation4 + $0x2c8] sm:$0xff]
    %v314 = vld [vmem:[#allocation4 + $0x2d0] sm:$0xff]
    %v315 = vld [vmem:[#allocation4 + $0x2d8] sm:$0xff]
    %v316 = vld [vmem:[#allocation4 + $0x2e0] sm:$0xff]
    %v317 = vld [vmem:[#allocation4 + $0x2e8] sm:$0xff]
    %v318 = vld [vmem:[#allocation4 + $0x2f0] sm:$0xf]
    %v319 = vld [vmem:[#allocation4 + $0x2f4] sm:$0xff]
    %v320 = vld [vmem:[#allocation4 + $0x2fc] sm:$0xff]
    %v321 = vld [vmem:[#allocation4 + $0x304] sm:$0xff]
    %v322 = vld [vmem:[#allocation4 + $0x30c] sm:$0xff]
    %v323 = vld [vmem:[#allocation4 + $0x314] sm:$0xff]
    %v324 = vld [vmem:[#allocation4 + $0x31c] sm:$0xff]
    %v325 = vld [vmem:[#allocation4 + $0x324] sm:$0xff]
    %v326 = vld [vmem:[#allocation4 + $0x32c] sm:$0xff]
    %v327 = vld [vmem:[#allocation4 + $0x334] sm:$0xff]
    %v328 = vld [vmem:[#allocation4 + $0x33c] sm:$0xff]
    %v329 = vld [vmem:[#allocation4 + $0x344] sm:$0xff]
    %v330 = vld [vmem:[#allocation4 + $0x34c] sm:$0xff]
    %v331 = vld [vmem:[#allocation4 + $0x354] sm:$0xff]
    %v332 = vld [vmem:[#allocation4 + $0x35c] sm:$0xf]
    %v333 = vld [vmem:[#allocation4 + $0x360] sm:$0xff]
    %v334 = vld [vmem:[#allocation4 + $0x368] sm:$0xff]
    %v335 = vld [vmem:[#allocation4 + $0x370] sm:$0xff]
    %v336 = vld [vmem:[#allocation4 + $0x378] sm:$0xff]
    %v337 = vld [vmem:[#allocation4 + $0x380] sm:$0xff]
    %v338 = vld [vmem:[#allocation4 + $0x388] sm:$0xff]
    %v339 = vld [vmem:[#allocation4 + $0x390] sm:$0xff]
    %v340 = vld [vmem:[#allocation4 + $0x398] sm:$0xff]
    %v341 = vld [vmem:[#allocation4 + $0x3a0] sm:$0xff]
    %v342 = vld [vmem:[#allocation4 + $0x3a8] sm:$0xff]
    %v343 = vld [vmem:[#allocation4 + $0x3b0] sm:$0xff]
    %v344 = vld [vmem:[#allocation4 + $0x3b8] sm:$0xff]
    %v345 = vld [vmem:[#allocation4 + $0x3c0] sm:$0xff]
    %v346 = vld [vmem:[#allocation4 + $0x3c8] sm:$0xf]
    %v347 = vld [vmem:[#allocation4 + $0x3cc] sm:$0xff]
    %v348 = vld [vmem:[#allocation4 + $0x3d4] sm:$0xff]
    %v349 = vld [vmem:[#allocation4 + $0x3dc] sm:$0xff]
    %v350 = vld [vmem:[#allocation4 + $0x3e4] sm:$0xff]
    %v351 = vld [vmem:[#allocation4 + $0x3ec] sm:$0xff]
    %v352 = vld [vmem:[#allocation4 + $0x3f4] sm:$0xff]
    %v353 = vld [vmem:[#allocation4 + $0x3fc] sm:$0xff]
    %v354 = vld [vmem:[#allocation4 + $0x404] sm:$0xff]
    %v355 = vld [vmem:[#allocation4 + $0x40c] sm:$0xff]
    %v356 = vld [vmem:[#allocation4 + $0x414] sm:$0xff]
    %v357 = vld [vmem:[#allocation4 + $0x41c] sm:$0xff]
    %v358 = vld [vmem:[#allocation4 + $0x424] sm:$0xff]
    %v359 = vld [vmem:[#allocation4 + $0x42c] sm:$0xff]
    %v360 = vld [vmem:[#allocation4 + $0x434] sm:$0xf]
    %v361 = vld [vmem:[#allocation4 + $0x438] sm:$0xff]
    %v362 = vld [vmem:[#allocation4 + $0x440] sm:$0xff]
    %v363 = vld [vmem:[#allocation4 + $0x448] sm:$0xff]
    %v364 = vld [vmem:[#allocation4 + $0x450] sm:$0xff]
    %v365 = vld [vmem:[#allocation4 + $0x458] sm:$0xff]
    %v366 = vld [vmem:[#allocation4 + $0x460] sm:$0xff]
    %v367 = vld [vmem:[#allocation4 + $0x468] sm:$0xff]
    %v368 = vld [vmem:[#allocation4 + $0x470] sm:$0xff]
    %v369 = vld [vmem:[#allocation4 + $0x478] sm:$0xff]
    %v370 = vld [vmem:[#allocation4 + $0x480] sm:$0xff]
    %v371 = vld [vmem:[#allocation4 + $0x488] sm:$0xff]
    %v372 = vld [vmem:[#allocation4 + $0x490] sm:$0xff]
    %v373 = vld [vmem:[#allocation4 + $0x498] sm:$0xff]
    %v374 = vld [vmem:[#allocation4 + $0x4a0] sm:$0xf]
    %v375 = vld [vmem:[#allocation4 + $0x4a4] sm:$0xff]
    %v376 = vld [vmem:[#allocation4 + $0x4ac] sm:$0xff]
    %v377 = vld [vmem:[#allocation4 + $0x4b4] sm:$0xff]
    %v378 = vld [vmem:[#allocation4 + $0x4bc] sm:$0xff]
    %v379 = vld [vmem:[#allocation4 + $0x4c4] sm:$0xff]
    %v380 = vld [vmem:[#allocation4 + $0x4cc] sm:$0xff]
    %v381 = vld [vmem:[#allocation4 + $0x4d4] sm:$0xff]
    %v382 = vld [vmem:[#allocation4 + $0x4dc] sm:$0xff]
    %v383 = vld [vmem:[#allocation4 + $0x4e4] sm:$0xff]
    %v384 = vld [vmem:[#allocation4 + $0x4ec] sm:$0xff]
    %v385 = vld [vmem:[#allocation4 + $0x4f4] sm:$0xff]
    %v386 = vld [vmem:[#allocation4 + $0x4fc] sm:$0xff]
    %v387 = vld [vmem:[#allocation4 + $0x504] sm:$0xff]
    %v388 = vld [vmem:[#allocation4 + $0x50c] sm:$0xf]
    %v389 = vld [vmem:[#allocation4 + $0x510] sm:$0xff]
    %v390 = vld [vmem:[#allocation4 + $0x518] sm:$0xff]
    %v391 = vld [vmem:[#allocation4 + $0x520] sm:$0xff]
    %v392 = vld [vmem:[#allocation4 + $0x528] sm:$0xff]
    %v393 = vld [vmem:[#allocation4 + $0x530] sm:$0xff]
    %v394 = vld [vmem:[#allocation4 + $0x538] sm:$0xff]
    %v395 = vld [vmem:[#allocation4 + $0x540] sm:$0xff]
    %v396 = vld [vmem:[#allocation4 + $0x548] sm:$0xff]
    %v397 = vld [vmem:[#allocation4 + $0x550] sm:$0xff]
    %v398 = vld [vmem:[#allocation4 + $0x558] sm:$0xff]
    %v399 = vld [vmem:[#allocation4 + $0x560] sm:$0xff]
    %v400 = vld [vmem:[#allocation4 + $0x568] sm:$0xff]
    %v401 = vld [vmem:[#allocation4 + $0x570] sm:$0xff]
    %v402 = vld [vmem:[#allocation4 + $0x578] sm:$0xf]
    %v403 = vld [vmem:[#allocation4 + $0x57c] sm:$0xff]
    %v404 = vld [vmem:[#allocation4 + $0x584] sm:$0xff]
    %v405 = vld [vmem:[#allocation4 + $0x58c] sm:$0xff]
    %v406 = vld [vmem:[#allocation4 + $0x594] sm:$0xff]
    %v407 = vld [vmem:[#allocation4 + $0x59c] sm:$0xff]
    %v408 = vld [vmem:[#allocation4 + $0x5a4] sm:$0xff]
    %v409 = vld [vmem:[#allocation4 + $0x5ac] sm:$0xff]
    %v410 = vld [vmem:[#allocation4 + $0x5b4] sm:$0xff]
    %v411 = vld [vmem:[#allocation4 + $0x5bc] sm:$0xff]
    %v412 = vld [vmem:[#allocation4 + $0x5c4] sm:$0xff]
    %v413 = vld [vmem:[#allocation4 + $0x5cc] sm:$0xff]
    %v414 = vld [vmem:[#allocation4 + $0x5d4] sm:$0xff]
    %v415 = vld [vmem:[#allocation4 + $0x5dc] sm:$0xff]
    %v416 = vld [vmem:[#allocation4 + $0x5e4] sm:$0xf]
    %v417 = vld [vmem:[#allocation4 + $0x5e8] sm:$0xff]
    %v418 = vld [vmem:[#allocation4 + $0x5f0] sm:$0xff]
    %v419 = vld [vmem:[#allocation4 + $0x5f8] sm:$0xff]
    %v420 = vld [vmem:[#allocation4 + $0x600] sm:$0xff]
    %v421 = vld [vmem:[#allocation4 + $0x608] sm:$0xff]
    %v422 = vld [vmem:[#allocation4 + $0x610] sm:$0xff]
    %v423 = vld [vmem:[#allocation4 + $0x618] sm:$0xff]
    %v424 = vld [vmem:[#allocation4 + $0x620] sm:$0xff]
    %v425 = vld [vmem:[#allocation4 + $0x628] sm:$0xff]
    %v426 = vld [vmem:[#allocation4 + $0x630] sm:$0xff]
    %v427 = vld [vmem:[#allocation4 + $0x638] sm:$0xff]
    %v428 = vld [vmem:[#allocation4 + $0x640] sm:$0xff]
    %v429 = vld [vmem:[#allocation4 + $0x648] sm:$0xff]
    %v430 = vld [vmem:[#allocation4 + $0x650] sm:$0xf]
    %v431 = vld [vmem:[#allocation4 + $0x654] sm:$0xff]
    %v432 = vld [vmem:[#allocation4 + $0x65c] sm:$0xff]
    %v433 = vld [vmem:[#allocation4 + $0x664] sm:$0xff]
    %v434 = vld [vmem:[#allocation4 + $0x66c] sm:$0xff]
    %v435 = vld [vmem:[#allocation4 + $0x674] sm:$0xff]
    %v436 = vld [vmem:[#allocation4 + $0x67c] sm:$0xff]
    %v437 = vld [vmem:[#allocation4 + $0x684] sm:$0xff]
    %v438 = vld [vmem:[#allocation4 + $0x68c] sm:$0xff]
    %v439 = vld [vmem:[#allocation4 + $0x694] sm:$0xff]
    %v440 = vld [vmem:[#allocation4 + $0x69c] sm:$0xff]
    %v441 = vld [vmem:[#allocation4 + $0x6a4] sm:$0xff]
    %v442 = vld [vmem:[#allocation4 + $0x6ac] sm:$0xff]
    %v443 = vld [vmem:[#allocation4 + $0x6b4] sm:$0xff]
    %v444 = vld [vmem:[#allocation4 + $0x6bc] sm:$0xf]
    %v445 = vld [vmem:[#allocation4 + $0x6c0] sm:$0xff]
    %v446 = vld [vmem:[#allocation4 + $0x6c8] sm:$0xff]
    %v447 = vld [vmem:[#allocation4 + $0x6d0] sm:$0xff]
    %v448 = vld [vmem:[#allocation4 + $0x6d8] sm:$0xff]
    %v449 = vld [vmem:[#allocation4 + $0x6e0] sm:$0xff]
    %v450 = vld [vmem:[#allocation4 + $0x6e8] sm:$0xff]
    %v451 = vld [vmem:[#allocation4 + $0x6f0] sm:$0xff]
    %v452 = vld [vmem:[#allocation4 + $0x6f8] sm:$0xff]
    %v453 = vld [vmem:[#allocation4 + $0x700] sm:$0xff]
    %v454 = vld [vmem:[#allocation4 + $0x708] sm:$0xff]
    %v455 = vld [vmem:[#allocation4 + $0x710] sm:$0xff]
    %v456 = vld [vmem:[#allocation4 + $0x718] sm:$0xff]
    %v457 = vld [vmem:[#allocation4 + $0x720] sm:$0xff]
    %v458 = vld [vmem:[#allocation4 + $0x728] sm:$0xf]
    %v459 = vld [vmem:[#allocation4 + $0x72c] sm:$0xff]
    %v460 = vld [vmem:[#allocation4 + $0x734] sm:$0xff]
    %v461 = vld [vmem:[#allocation4 + $0x73c] sm:$0xff]
    %v462 = vld [vmem:[#allocation4 + $0x744] sm:$0xff]
    %v463 = vld [vmem:[#allocation4 + $0x74c] sm:$0xff]
    %v464 = vld [vmem:[#allocation4 + $0x754] sm:$0xff]
    %v465 = vld [vmem:[#allocation4 + $0x75c] sm:$0xff]
    %v466 = vld [vmem:[#allocation4 + $0x764] sm:$0xff]
    %v467 = vld [vmem:[#allocation4 + $0x76c] sm:$0xff]
    %v468 = vld [vmem:[#allocation4 + $0x774] sm:$0xff]
    %v469 = vld [vmem:[#allocation4 + $0x77c] sm:$0xff]
    %v470 = vld [vmem:[#allocation4 + $0x784] sm:$0xff]
    %v471 = vld [vmem:[#allocation4 + $0x78c] sm:$0xff]
    %v472 = vld [vmem:[#allocation4 + $0x794] sm:$0xf]
    %v473 = vld [vmem:[#allocation4 + $0x798] sm:$0xff]
    %v474 = vld [vmem:[#allocation4 + $0x7a0] sm:$0xff]
    %v475 = vld [vmem:[#allocation4 + $0x7a8] sm:$0xff]
    %v476 = vld [vmem:[#allocation4 + $0x7b0] sm:$0xff]
    %v477 = vld [vmem:[#allocation4 + $0x7b8] sm:$0xff]
    %v478 = vld [vmem:[#allocation4 + $0x7c0] sm:$0xff]
    %v479 = vld [vmem:[#allocation4 + $0x7c8] sm:$0xff]
    %v480 = vld [vmem:[#allocation4 + $0x7d0] sm:$0xff]
    %v481 = vld [vmem:[#allocation4 + $0x7d8] sm:$0xff]
    %v482 = vld [vmem:[#allocation4 + $0x7e0] sm:$0xff]
    %v483 = vld [vmem:[#allocation4 + $0x7e8] sm:$0xff]
    %v484 = vld [vmem:[#allocation4 + $0x7f0] sm:$0xff]
    %v485 = vld [vmem:[#allocation4 + $0x7f8] sm:$0xff]
    %v486 = vld [vmem:[#allocation4 + $0x800] sm:$0xf]
    %v487 = vld [vmem:[#allocation4 + $0x804] sm:$0xff]
    %v488 = vld [vmem:[#allocation4 + $0x80c] sm:$0xff]
    %v489 = vld [vmem:[#allocation4 + $0x814] sm:$0xff]
    %v490 = vld [vmem:[#allocation4 + $0x81c] sm:$0xff]
    %v491 = vld [vmem:[#allocation4 + $0x824] sm:$0xff]
    %v492 = vld [vmem:[#allocation4 + $0x82c] sm:$0xff]
    %v493 = vld [vmem:[#allocation4 + $0x834] sm:$0xff]
    %v494 = vld [vmem:[#allocation4 + $0x83c] sm:$0xff]
    %v495 = vld [vmem:[#allocation4 + $0x844] sm:$0xff]
    %v496 = vld [vmem:[#allocation4 + $0x84c] sm:$0xff]
    %v497 = vld [vmem:[#allocation4 + $0x854] sm:$0xff]
    %v498 = vld [vmem:[#allocation4 + $0x85c] sm:$0xff]
    %v499 = vld [vmem:[#allocation4 + $0x864] sm:$0xff]
    %v500 = vld [vmem:[#allocation4 + $0x86c] sm:$0xf]
    %v501 = vld [vmem:[#allocation6] sm:$0xff]
    %v502 = vld [vmem:[#allocation6 + $0x8] sm:$0xff]
    %v503 = vld [vmem:[#allocation6 + $0x10] sm:$0xff]
    %v504 = vld [vmem:[#allocation6 + $0x18] sm:$0x7]
    %v505 = vunpack.c.l.bf16 %v501
    %v506 = vunpack.c.h.bf16 %v501
    %v507 = vunpack.c.l.bf16 %v502
    %v508 = vunpack.c.h.bf16 %v502
    %v509 = vunpack.c.l.bf16 %v503
    %v510 = vunpack.c.h.bf16 %v503
    %v511 = vunpack.c.l.bf16 %v504
    %v519 = vlaneseq
    %v520 = vshrl.u32 %v519, 7
    %v521 = vsub.s32 0, %v520
    %v522 = vrot.slane %v505, %v521
    %v523 = vlaneseq
    %v524 = vshrl.u32 %v523, 7
    %v525 = vsub.s32 2, %v524
    %v526 = vrot.slane %v505, %v525
    %v527 = vlaneseq
    %v528 = vshrl.u32 %v527, 7
    %v529 = vsub.s32 4, %v528
    %v530 = vrot.slane %v505, %v529
    %v531 = vlaneseq
    %v532 = vshrl.u32 %v531, 7
    %v533 = vsub.s32 6, %v532
    %v534 = vrot.slane %v505, %v533
    %v535 = vlaneseq
    %v536 = vshrl.u32 %v535, 7
    %v537 = vsub.s32 0, %v536
    %v538 = vrot.slane %v506, %v537
    %v539 = vlaneseq
    %v540 = vshrl.u32 %v539, 7
    %v541 = vsub.s32 2, %v540
    %v542 = vrot.slane %v506, %v541
    %v543 = vlaneseq
    %v544 = vshrl.u32 %v543, 7
    %v545 = vsub.s32 4, %v544
    %v546 = vrot.slane %v506, %v545
    %v547 = vlaneseq
    %v548 = vshrl.u32 %v547, 7
    %v549 = vsub.s32 6, %v548
    %v550 = vrot.slane %v506, %v549
    %v551 = vlaneseq
    %v552 = vshrl.u32 %v551, 7
    %v553 = vsub.s32 0, %v552
    %v554 = vrot.slane %v507, %v553
    %v555 = vlaneseq
    %v556 = vshrl.u32 %v555, 7
    %v557 = vsub.s32 2, %v556
    %v558 = vrot.slane %v507, %v557
    %v559 = vlaneseq
    %v560 = vshrl.u32 %v559, 7
    %v561 = vsub.s32 4, %v560
    %v562 = vrot.slane %v507, %v561
    %v563 = vlaneseq
    %v564 = vshrl.u32 %v563, 7
    %v565 = vsub.s32 6, %v564
    %v566 = vrot.slane %v507, %v565
    %v567 = vlaneseq
    %v568 = vshrl.u32 %v567, 7
    %v569 = vsub.s32 0, %v568
    %v570 = vrot.slane %v508, %v569
    %v571 = vlaneseq
    %v572 = vshrl.u32 %v571, 7
    %v573 = vsub.s32 2, %v572
    %v574 = vrot.slane %v508, %v573
    %v575 = vlaneseq
    %v576 = vshrl.u32 %v575, 7
    %v577 = vsub.s32 4, %v576
    %v578 = vrot.slane %v508, %v577
    %v579 = vlaneseq
    %v580 = vshrl.u32 %v579, 7
    %v581 = vsub.s32 6, %v580
    %v582 = vrot.slane %v508, %v581
    %v583 = vlaneseq
    %v584 = vshrl.u32 %v583, 7
    %v585 = vsub.s32 0, %v584
    %v586 = vrot.slane %v509, %v585
    %v587 = vlaneseq
    %v588 = vshrl.u32 %v587, 7
    %v589 = vsub.s32 2, %v588
    %v590 = vrot.slane %v509, %v589
    %v591 = vlaneseq
    %v592 = vshrl.u32 %v591, 7
    %v593 = vsub.s32 4, %v592
    %v594 = vrot.slane %v509, %v593
    %v595 = vlaneseq
    %v596 = vshrl.u32 %v595, 7
    %v597 = vsub.s32 6, %v596
    %v598 = vrot.slane %v509, %v597
    %v599 = vlaneseq
    %v600 = vshrl.u32 %v599, 7
    %v601 = vsub.s32 0, %v600
    %v602 = vrot.slane %v510, %v601
    %v603 = vlaneseq
    %v604 = vshrl.u32 %v603, 7
    %v605 = vsub.s32 2, %v604
    %v606 = vrot.slane %v510, %v605
    %v607 = vlaneseq
    %v608 = vshrl.u32 %v607, 7
    %v609 = vsub.s32 4, %v608
    %v610 = vrot.slane %v510, %v609
    %v611 = vlaneseq
    %v612 = vshrl.u32 %v611, 7
    %v613 = vsub.s32 6, %v612
    %v614 = vrot.slane %v510, %v613
    %v615 = vlaneseq
    %v616 = vshrl.u32 %v615, 7
    %v617 = vsub.s32 0, %v616
    %v618 = vrot.slane %v511, %v617
    %v619 = vlaneseq
    %v620 = vshrl.u32 %v619, 7
    %v621 = vsub.s32 2, %v620
    %v622 = vrot.slane %v511, %v621
    %v623 = vlaneseq
    %v624 = vshrl.u32 %v623, 7
    %v625 = vsub.s32 4, %v624
    %v626 = vrot.slane %v511, %v625
    %v654 = vlaneseq
    %v655 = vshrl.u32 %v654, 7
    %v656 = vsub.s32 0, %v655
    %v657 = vrot.slane %v522, %v656
    %v658 = vlaneseq
    %v659 = vshrl.u32 %v658, 7
    %v660 = vsub.s32 0, %v659
    %v661 = vrot.slane %v526, %v660
    %v662 = vlaneseq
    %v663 = vshrl.u32 %v662, 7
    %v664 = vsub.s32 0, %v663
    %v665 = vrot.slane %v530, %v664
    %v666 = vlaneseq
    %v667 = vshrl.u32 %v666, 7
    %v668 = vsub.s32 0, %v667
    %v669 = vrot.slane %v534, %v668
    %v670 = vlaneseq
    %v671 = vshrl.u32 %v670, 7
    %v672 = vsub.s32 0, %v671
    %v673 = vrot.slane %v538, %v672
    %v674 = vlaneseq
    %v675 = vshrl.u32 %v674, 7
    %v676 = vsub.s32 0, %v675
    %v677 = vrot.slane %v542, %v676
    %v678 = vlaneseq
    %v679 = vshrl.u32 %v678, 7
    %v680 = vsub.s32 0, %v679
    %v681 = vrot.slane %v546, %v680
    %v682 = vlaneseq
    %v683 = vshrl.u32 %v682, 7
    %v684 = vsub.s32 0, %v683
    %v685 = vrot.slane %v550, %v684
    %v686 = vlaneseq
    %v687 = vshrl.u32 %v686, 7
    %v688 = vsub.s32 0, %v687
    %v689 = vrot.slane %v554, %v688
    %v690 = vlaneseq
    %v691 = vshrl.u32 %v690, 7
    %v692 = vsub.s32 0, %v691
    %v693 = vrot.slane %v558, %v692
    %v694 = vlaneseq
    %v695 = vshrl.u32 %v694, 7
    %v696 = vsub.s32 0, %v695
    %v697 = vrot.slane %v562, %v696
    %v698 = vlaneseq
    %v699 = vshrl.u32 %v698, 7
    %v700 = vsub.s32 0, %v699
    %v701 = vrot.slane %v566, %v700
    %v702 = vlaneseq
    %v703 = vshrl.u32 %v702, 7
    %v704 = vsub.s32 0, %v703
    %v705 = vrot.slane %v570, %v704
    %v706 = vlaneseq
    %v707 = vshrl.u32 %v706, 7
    %v708 = vsub.s32 0, %v707
    %v709 = vrot.slane %v574, %v708
    %v710 = vlaneseq
    %v711 = vshrl.u32 %v710, 7
    %v712 = vsub.s32 0, %v711
    %v713 = vrot.slane %v578, %v712
    %v714 = vlaneseq
    %v715 = vshrl.u32 %v714, 7
    %v716 = vsub.s32 0, %v715
    %v717 = vrot.slane %v582, %v716
    %v718 = vlaneseq
    %v719 = vshrl.u32 %v718, 7
    %v720 = vsub.s32 0, %v719
    %v721 = vrot.slane %v586, %v720
    %v722 = vlaneseq
    %v723 = vshrl.u32 %v722, 7
    %v724 = vsub.s32 0, %v723
    %v725 = vrot.slane %v590, %v724
    %v726 = vlaneseq
    %v727 = vshrl.u32 %v726, 7
    %v728 = vsub.s32 0, %v727
    %v729 = vrot.slane %v594, %v728
    %v730 = vlaneseq
    %v731 = vshrl.u32 %v730, 7
    %v732 = vsub.s32 0, %v731
    %v733 = vrot.slane %v598, %v732
    %v734 = vlaneseq
    %v735 = vshrl.u32 %v734, 7
    %v736 = vsub.s32 0, %v735
    %v737 = vrot.slane %v602, %v736
    %v738 = vlaneseq
    %v739 = vshrl.u32 %v738, 7
    %v740 = vsub.s32 0, %v739
    %v741 = vrot.slane %v606, %v740
    %v742 = vlaneseq
    %v743 = vshrl.u32 %v742, 7
    %v744 = vsub.s32 0, %v743
    %v745 = vrot.slane %v610, %v744
    %v746 = vlaneseq
    %v747 = vshrl.u32 %v746, 7
    %v748 = vsub.s32 0, %v747
    %v749 = vrot.slane %v614, %v748
    %v750 = vlaneseq
    %v751 = vshrl.u32 %v750, 7
    %v752 = vsub.s32 0, %v751
    %v753 = vrot.slane %v618, %v752
    %v754 = vlaneseq
    %v755 = vshrl.u32 %v754, 7
    %v756 = vsub.s32 0, %v755
    %v757 = vrot.slane %v622, %v756
    %v758 = vlaneseq
    %v759 = vshrl.u32 %v758, 7
    %v760 = vsub.s32 0, %v759
    %v761 = vrot.slane %v626, %v760
    %v1042 = vunpack.c.l.b16 %v221
    %v1043 = vunpack.c.h.b16 %v221
    %v1044 = vunpack.c.l.b16 %v222
    %v1045 = vunpack.c.h.b16 %v222
    %v1046 = vunpack.c.l.b16 %v223
    %v1047 = vunpack.c.h.b16 %v223
    %v1048 = vunpack.c.l.b16 %v224
    %v1049 = vunpack.c.h.b16 %v224
    %v1050 = vunpack.c.l.b16 %v225
    %v1051 = vunpack.c.h.b16 %v225
    %v1052 = vunpack.c.l.b16 %v226
    %v1053 = vunpack.c.h.b16 %v226
    %v1054 = vunpack.c.l.b16 %v227
    %v1055 = vunpack.c.h.b16 %v227
    %v1056 = vunpack.c.l.b16 %v228
    %v1057 = vunpack.c.h.b16 %v228
    %v1058 = vunpack.c.l.b16 %v229
    %v1059 = vunpack.c.h.b16 %v229
    %v1060 = vunpack.c.l.b16 %v230
    %v1061 = vunpack.c.h.b16 %v230
    %v1062 = vunpack.c.l.b16 %v231
    %v1063 = vunpack.c.h.b16 %v231
    %v1064 = vunpack.c.l.b16 %v232
    %v1065 = vunpack.c.h.b16 %v232
    %v1066 = vunpack.c.l.b16 %v233
    %v1067 = vunpack.c.h.b16 %v233
    %v1068 = vunpack.c.l.b16 %v234
    %v1069 = vunpack.c.l.b16 %v235
    %v1070 = vunpack.c.h.b16 %v235
    %v1071 = vunpack.c.l.b16 %v236
    %v1072 = vunpack.c.h.b16 %v236
    %v1073 = vunpack.c.l.b16 %v237
    %v1074 = vunpack.c.h.b16 %v237
    %v1075 = vunpack.c.l.b16 %v238
    %v1076 = vunpack.c.h.b16 %v238
    %v1077 = vunpack.c.l.b16 %v239
    %v1078 = vunpack.c.h.b16 %v239
    %v1079 = vunpack.c.l.b16 %v240
    %v1080 = vunpack.c.h.b16 %v240
    %v1081 = vunpack.c.l.b16 %v241
    %v1082 = vunpack.c.h.b16 %v241
    %v1083 = vunpack.c.l.b16 %v242
    %v1084 = vunpack.c.h.b16 %v242
    %v1085 = vunpack.c.l.b16 %v243
    %v1086 = vunpack.c.h.b16 %v243
    %v1087 = vunpack.c.l.b16 %v244
    %v1088 = vunpack.c.h.b16 %v244
    %v1089 = vunpack.c.l.b16 %v245
    %v1090 = vunpack.c.h.b16 %v245
    %v1091 = vunpack.c.l.b16 %v246
    %v1092 = vunpack.c.h.b16 %v246
    %v1093 = vunpack.c.l.b16 %v247
    %v1094 = vunpack.c.h.b16 %v247
    %v1095 = vunpack.c.l.b16 %v248
    %v1096 = vunpack.c.l.b16 %v249
    %v1097 = vunpack.c.h.b16 %v249
    %v1098 = vunpack.c.l.b16 %v250
    %v1099 = vunpack.c.h.b16 %v250
    %v1100 = vunpack.c.l.b16 %v251
    %v1101 = vunpack.c.h.b16 %v251
    %v1102 = vunpack.c.l.b16 %v252
    %v1103 = vunpack.c.h.b16 %v252
    %v1104 = vunpack.c.l.b16 %v253
    %v1105 = vunpack.c.h.b16 %v253
    %v1106 = vunpack.c.l.b16 %v254
    %v1107 = vunpack.c.h.b16 %v254
    %v1108 = vunpack.c.l.b16 %v255
    %v1109 = vunpack.c.h.b16 %v255
    %v1110 = vunpack.c.l.b16 %v256
    %v1111 = vunpack.c.h.b16 %v256
    %v1112 = vunpack.c.l.b16 %v257
    %v1113 = vunpack.c.h.b16 %v257
    %v1114 = vunpack.c.l.b16 %v258
    %v1115 = vunpack.c.h.b16 %v258
    %v1116 = vunpack.c.l.b16 %v259
    %v1117 = vunpack.c.h.b16 %v259
    %v1118 = vunpack.c.l.b16 %v260
    %v1119 = vunpack.c.h.b16 %v260
    %v1120 = vunpack.c.l.b16 %v261
    %v1121 = vunpack.c.h.b16 %v261
    %v1122 = vunpack.c.l.b16 %v262
    %v1123 = vunpack.c.l.b16 %v263
    %v1124 = vunpack.c.h.b16 %v263
    %v1125 = vunpack.c.l.b16 %v264
    %v1126 = vunpack.c.h.b16 %v264
    %v1127 = vunpack.c.l.b16 %v265
    %v1128 = vunpack.c.h.b16 %v265
    %v1129 = vunpack.c.l.b16 %v266
    %v1130 = vunpack.c.h.b16 %v266
    %v1131 = vunpack.c.l.b16 %v267
    %v1132 = vunpack.c.h.b16 %v267
    %v1133 = vunpack.c.l.b16 %v268
    %v1134 = vunpack.c.h.b16 %v268
    %v1135 = vunpack.c.l.b16 %v269
    %v1136 = vunpack.c.h.b16 %v269
    %v1137 = vunpack.c.l.b16 %v270
    %v1138 = vunpack.c.h.b16 %v270
    %v1139 = vunpack.c.l.b16 %v271
    %v1140 = vunpack.c.h.b16 %v271
    %v1141 = vunpack.c.l.b16 %v272
    %v1142 = vunpack.c.h.b16 %v272
    %v1143 = vunpack.c.l.b16 %v273
    %v1144 = vunpack.c.h.b16 %v273
    %v1145 = vunpack.c.l.b16 %v274
    %v1146 = vunpack.c.h.b16 %v274
    %v1147 = vunpack.c.l.b16 %v275
    %v1148 = vunpack.c.h.b16 %v275
    %v1149 = vunpack.c.l.b16 %v276
    %v1150 = vunpack.c.l.b16 %v277
    %v1151 = vunpack.c.h.b16 %v277
    %v1152 = vunpack.c.l.b16 %v278
    %v1153 = vunpack.c.h.b16 %v278
    %v1154 = vunpack.c.l.b16 %v279
    %v1155 = vunpack.c.h.b16 %v279
    %v1156 = vunpack.c.l.b16 %v280
    %v1157 = vunpack.c.h.b16 %v280
    %v1158 = vunpack.c.l.b16 %v281
    %v1159 = vunpack.c.h.b16 %v281
    %v1160 = vunpack.c.l.b16 %v282
    %v1161 = vunpack.c.h.b16 %v282
    %v1162 = vunpack.c.l.b16 %v283
    %v1163 = vunpack.c.h.b16 %v283
    %v1164 = vunpack.c.l.b16 %v284
    %v1165 = vunpack.c.h.b16 %v284
    %v1166 = vunpack.c.l.b16 %v285
    %v1167 = vunpack.c.h.b16 %v285
    %v1168 = vunpack.c.l.b16 %v286
    %v1169 = vunpack.c.h.b16 %v286
    %v1170 = vunpack.c.l.b16 %v287
    %v1171 = vunpack.c.h.b16 %v287
    %v1172 = vunpack.c.l.b16 %v288
    %v1173 = vunpack.c.h.b16 %v288
    %v1174 = vunpack.c.l.b16 %v289
    %v1175 = vunpack.c.h.b16 %v289
    %v1176 = vunpack.c.l.b16 %v290
    %v1177 = vunpack.c.l.b16 %v291
    %v1178 = vunpack.c.h.b16 %v291
    %v1179 = vunpack.c.l.b16 %v292
    %v1180 = vunpack.c.h.b16 %v292
    %v1181 = vunpack.c.l.b16 %v293
    %v1182 = vunpack.c.h.b16 %v293
    %v1183 = vunpack.c.l.b16 %v294
    %v1184 = vunpack.c.h.b16 %v294
    %v1185 = vunpack.c.l.b16 %v295
    %v1186 = vunpack.c.h.b16 %v295
    %v1187 = vunpack.c.l.b16 %v296
    %v1188 = vunpack.c.h.b16 %v296
    %v1189 = vunpack.c.l.b16 %v297
    %v1190 = vunpack.c.h.b16 %v297
    %v1191 = vunpack.c.l.b16 %v298
    %v1192 = vunpack.c.h.b16 %v298
    %v1193 = vunpack.c.l.b16 %v299
    %v1194 = vunpack.c.h.b16 %v299
    %v1195 = vunpack.c.l.b16 %v300
    %v1196 = vunpack.c.h.b16 %v300
    %v1197 = vunpack.c.l.b16 %v301
    %v1198 = vunpack.c.h.b16 %v301
    %v1199 = vunpack.c.l.b16 %v302
    %v1200 = vunpack.c.h.b16 %v302
    %v1201 = vunpack.c.l.b16 %v303
    %v1202 = vunpack.c.h.b16 %v303
    %v1203 = vunpack.c.l.b16 %v304
    %v1204 = vunpack.c.l.b16 %v305
    %v1205 = vunpack.c.h.b16 %v305
    %v1206 = vunpack.c.l.b16 %v306
    %v1207 = vunpack.c.h.b16 %v306
    %v1208 = vunpack.c.l.b16 %v307
    %v1209 = vunpack.c.h.b16 %v307
    %v1210 = vunpack.c.l.b16 %v308
    %v1211 = vunpack.c.h.b16 %v308
    %v1212 = vunpack.c.l.b16 %v309
    %v1213 = vunpack.c.h.b16 %v309
    %v1214 = vunpack.c.l.b16 %v310
    %v1215 = vunpack.c.h.b16 %v310
    %v1216 = vunpack.c.l.b16 %v311
    %v1217 = vunpack.c.h.b16 %v311
    %v1218 = vunpack.c.l.b16 %v312
    %v1219 = vunpack.c.h.b16 %v312
    %v1220 = vunpack.c.l.b16 %v313
    %v1221 = vunpack.c.h.b16 %v313
    %v1222 = vunpack.c.l.b16 %v314
    %v1223 = vunpack.c.h.b16 %v314
    %v1224 = vunpack.c.l.b16 %v315
    %v1225 = vunpack.c.h.b16 %v315
    %v1226 = vunpack.c.l.b16 %v316
    %v1227 = vunpack.c.h.b16 %v316
    %v1228 = vunpack.c.l.b16 %v317
    %v1229 = vunpack.c.h.b16 %v317
    %v1230 = vunpack.c.l.b16 %v318
    %v1231 = vunpack.c.l.b16 %v319
    %v1232 = vunpack.c.h.b16 %v319
    %v1233 = vunpack.c.l.b16 %v320
    %v1234 = vunpack.c.h.b16 %v320
    %v1235 = vunpack.c.l.b16 %v321
    %v1236 = vunpack.c.h.b16 %v321
    %v1237 = vunpack.c.l.b16 %v322
    %v1238 = vunpack.c.h.b16 %v322
    %v1239 = vunpack.c.l.b16 %v323
    %v1240 = vunpack.c.h.b16 %v323
    %v1241 = vunpack.c.l.b16 %v324
    %v1242 = vunpack.c.h.b16 %v324
    %v1243 = vunpack.c.l.b16 %v325
    %v1244 = vunpack.c.h.b16 %v325
    %v1245 = vunpack.c.l.b16 %v326
    %v1246 = vunpack.c.h.b16 %v326
    %v1247 = vunpack.c.l.b16 %v327
    %v1248 = vunpack.c.h.b16 %v327
    %v1249 = vunpack.c.l.b16 %v328
    %v1250 = vunpack.c.h.b16 %v328
    %v1251 = vunpack.c.l.b16 %v329
    %v1252 = vunpack.c.h.b16 %v329
    %v1253 = vunpack.c.l.b16 %v330
    %v1254 = vunpack.c.h.b16 %v330
    %v1255 = vunpack.c.l.b16 %v331
    %v1256 = vunpack.c.h.b16 %v331
    %v1257 = vunpack.c.l.b16 %v332
    %v1258 = vunpack.c.l.b16 %v333
    %v1259 = vunpack.c.h.b16 %v333
    %v1260 = vunpack.c.l.b16 %v334
    %v1261 = vunpack.c.h.b16 %v334
    %v1262 = vunpack.c.l.b16 %v335
    %v1263 = vunpack.c.h.b16 %v335
    %v1264 = vunpack.c.l.b16 %v336
    %v1265 = vunpack.c.h.b16 %v336
    %v1266 = vunpack.c.l.b16 %v337
    %v1267 = vunpack.c.h.b16 %v337
    %v1268 = vunpack.c.l.b16 %v338
    %v1269 = vunpack.c.h.b16 %v338
    %v1270 = vunpack.c.l.b16 %v339
    %v1271 = vunpack.c.h.b16 %v339
    %v1272 = vunpack.c.l.b16 %v340
    %v1273 = vunpack.c.h.b16 %v340
    %v1274 = vunpack.c.l.b16 %v341
    %v1275 = vunpack.c.h.b16 %v341
    %v1276 = vunpack.c.l.b16 %v342
    %v1277 = vunpack.c.h.b16 %v342
    %v1278 = vunpack.c.l.b16 %v343
    %v1279 = vunpack.c.h.b16 %v343
    %v1280 = vunpack.c.l.b16 %v344
    %v1281 = vunpack.c.h.b16 %v344
    %v1282 = vunpack.c.l.b16 %v345
    %v1283 = vunpack.c.h.b16 %v345
    %v1284 = vunpack.c.l.b16 %v346
    %v1285 = vunpack.c.l.b16 %v347
    %v1286 = vunpack.c.h.b16 %v347
    %v1287 = vunpack.c.l.b16 %v348
    %v1288 = vunpack.c.h.b16 %v348
    %v1289 = vunpack.c.l.b16 %v349
    %v1290 = vunpack.c.h.b16 %v349
    %v1291 = vunpack.c.l.b16 %v350
    %v1292 = vunpack.c.h.b16 %v350
    %v1293 = vunpack.c.l.b16 %v351
    %v1294 = vunpack.c.h.b16 %v351
    %v1295 = vunpack.c.l.b16 %v352
    %v1296 = vunpack.c.h.b16 %v352
    %v1297 = vunpack.c.l.b16 %v353
    %v1298 = vunpack.c.h.b16 %v353
    %v1299 = vunpack.c.l.b16 %v354
    %v1300 = vunpack.c.h.b16 %v354
    %v1301 = vunpack.c.l.b16 %v355
    %v1302 = vunpack.c.h.b16 %v355
    %v1303 = vunpack.c.l.b16 %v356
    %v1304 = vunpack.c.h.b16 %v356
    %v1305 = vunpack.c.l.b16 %v357
    %v1306 = vunpack.c.h.b16 %v357
    %v1307 = vunpack.c.l.b16 %v358
    %v1308 = vunpack.c.h.b16 %v358
    %v1309 = vunpack.c.l.b16 %v359
    %v1310 = vunpack.c.h.b16 %v359
    %v1311 = vunpack.c.l.b16 %v360
    %v1312 = vunpack.c.l.b16 %v361
    %v1313 = vunpack.c.h.b16 %v361
    %v1314 = vunpack.c.l.b16 %v362
    %v1315 = vunpack.c.h.b16 %v362
    %v1316 = vunpack.c.l.b16 %v363
    %v1317 = vunpack.c.h.b16 %v363
    %v1318 = vunpack.c.l.b16 %v364
    %v1319 = vunpack.c.h.b16 %v364
    %v1320 = vunpack.c.l.b16 %v365
    %v1321 = vunpack.c.h.b16 %v365
    %v1322 = vunpack.c.l.b16 %v366
    %v1323 = vunpack.c.h.b16 %v366
    %v1324 = vunpack.c.l.b16 %v367
    %v1325 = vunpack.c.h.b16 %v367
    %v1326 = vunpack.c.l.b16 %v368
    %v1327 = vunpack.c.h.b16 %v368
    %v1328 = vunpack.c.l.b16 %v369
    %v1329 = vunpack.c.h.b16 %v369
    %v1330 = vunpack.c.l.b16 %v370
    %v1331 = vunpack.c.h.b16 %v370
    %v1332 = vunpack.c.l.b16 %v371
    %v1333 = vunpack.c.h.b16 %v371
    %v1334 = vunpack.c.l.b16 %v372
    %v1335 = vunpack.c.h.b16 %v372
    %v1336 = vunpack.c.l.b16 %v373
    %v1337 = vunpack.c.h.b16 %v373
    %v1338 = vunpack.c.l.b16 %v374
    %v1339 = vunpack.c.l.b16 %v375
    %v1340 = vunpack.c.h.b16 %v375
    %v1341 = vunpack.c.l.b16 %v376
    %v1342 = vunpack.c.h.b16 %v376
    %v1343 = vunpack.c.l.b16 %v377
    %v1344 = vunpack.c.h.b16 %v377
    %v1345 = vunpack.c.l.b16 %v378
    %v1346 = vunpack.c.h.b16 %v378
    %v1347 = vunpack.c.l.b16 %v379
    %v1348 = vunpack.c.h.b16 %v379
    %v1349 = vunpack.c.l.b16 %v380
    %v1350 = vunpack.c.h.b16 %v380
    %v1351 = vunpack.c.l.b16 %v381
    %v1352 = vunpack.c.h.b16 %v381
    %v1353 = vunpack.c.l.b16 %v382
    %v1354 = vunpack.c.h.b16 %v382
    %v1355 = vunpack.c.l.b16 %v383
    %v1356 = vunpack.c.h.b16 %v383
    %v1357 = vunpack.c.l.b16 %v384
    %v1358 = vunpack.c.h.b16 %v384
    %v1359 = vunpack.c.l.b16 %v385
    %v1360 = vunpack.c.h.b16 %v385
    %v1361 = vunpack.c.l.b16 %v386
    %v1362 = vunpack.c.h.b16 %v386
    %v1363 = vunpack.c.l.b16 %v387
    %v1364 = vunpack.c.h.b16 %v387
    %v1365 = vunpack.c.l.b16 %v388
    %v1366 = vunpack.c.l.b16 %v389
    %v1367 = vunpack.c.h.b16 %v389
    %v1368 = vunpack.c.l.b16 %v390
    %v1369 = vunpack.c.h.b16 %v390
    %v1370 = vunpack.c.l.b16 %v391
    %v1371 = vunpack.c.h.b16 %v391
    %v1372 = vunpack.c.l.b16 %v392
    %v1373 = vunpack.c.h.b16 %v392
    %v1374 = vunpack.c.l.b16 %v393
    %v1375 = vunpack.c.h.b16 %v393
    %v1376 = vunpack.c.l.b16 %v394
    %v1377 = vunpack.c.h.b16 %v394
    %v1378 = vunpack.c.l.b16 %v395
    %v1379 = vunpack.c.h.b16 %v395
    %v1380 = vunpack.c.l.b16 %v396
    %v1381 = vunpack.c.h.b16 %v396
    %v1382 = vunpack.c.l.b16 %v397
    %v1383 = vunpack.c.h.b16 %v397
    %v1384 = vunpack.c.l.b16 %v398
    %v1385 = vunpack.c.h.b16 %v398
    %v1386 = vunpack.c.l.b16 %v399
    %v1387 = vunpack.c.h.b16 %v399
    %v1388 = vunpack.c.l.b16 %v400
    %v1389 = vunpack.c.h.b16 %v400
    %v1390 = vunpack.c.l.b16 %v401
    %v1391 = vunpack.c.h.b16 %v401
    %v1392 = vunpack.c.l.b16 %v402
    %v1393 = vunpack.c.l.b16 %v403
    %v1394 = vunpack.c.h.b16 %v403
    %v1395 = vunpack.c.l.b16 %v404
    %v1396 = vunpack.c.h.b16 %v404
    %v1397 = vunpack.c.l.b16 %v405
    %v1398 = vunpack.c.h.b16 %v405
    %v1399 = vunpack.c.l.b16 %v406
    %v1400 = vunpack.c.h.b16 %v406
    %v1401 = vunpack.c.l.b16 %v407
    %v1402 = vunpack.c.h.b16 %v407
    %v1403 = vunpack.c.l.b16 %v408
    %v1404 = vunpack.c.h.b16 %v408
    %v1405 = vunpack.c.l.b16 %v409
    %v1406 = vunpack.c.h.b16 %v409
    %v1407 = vunpack.c.l.b16 %v410
    %v1408 = vunpack.c.h.b16 %v410
    %v1409 = vunpack.c.l.b16 %v411
    %v1410 = vunpack.c.h.b16 %v411
    %v1411 = vunpack.c.l.b16 %v412
    %v1412 = vunpack.c.h.b16 %v412
    %v1413 = vunpack.c.l.b16 %v413
    %v1414 = vunpack.c.h.b16 %v413
    %v1415 = vunpack.c.l.b16 %v414
    %v1416 = vunpack.c.h.b16 %v414
    %v1417 = vunpack.c.l.b16 %v415
    %v1418 = vunpack.c.h.b16 %v415
    %v1419 = vunpack.c.l.b16 %v416
    %v1420 = vunpack.c.l.b16 %v417
    %v1421 = vunpack.c.h.b16 %v417
    %v1422 = vunpack.c.l.b16 %v418
    %v1423 = vunpack.c.h.b16 %v418
    %v1424 = vunpack.c.l.b16 %v419
    %v1425 = vunpack.c.h.b16 %v419
    %v1426 = vunpack.c.l.b16 %v420
    %v1427 = vunpack.c.h.b16 %v420
    %v1428 = vunpack.c.l.b16 %v421
    %v1429 = vunpack.c.h.b16 %v421
    %v1430 = vunpack.c.l.b16 %v422
    %v1431 = vunpack.c.h.b16 %v422
    %v1432 = vunpack.c.l.b16 %v423
    %v1433 = vunpack.c.h.b16 %v423
    %v1434 = vunpack.c.l.b16 %v424
    %v1435 = vunpack.c.h.b16 %v424
    %v1436 = vunpack.c.l.b16 %v425
    %v1437 = vunpack.c.h.b16 %v425
    %v1438 = vunpack.c.l.b16 %v426
    %v1439 = vunpack.c.h.b16 %v426
    %v1440 = vunpack.c.l.b16 %v427
    %v1441 = vunpack.c.h.b16 %v427
    %v1442 = vunpack.c.l.b16 %v428
    %v1443 = vunpack.c.h.b16 %v428
    %v1444 = vunpack.c.l.b16 %v429
    %v1445 = vunpack.c.h.b16 %v429
    %v1446 = vunpack.c.l.b16 %v430
    %v1447 = vunpack.c.l.b16 %v431
    %v1448 = vunpack.c.h.b16 %v431
    %v1449 = vunpack.c.l.b16 %v432
    %v1450 = vunpack.c.h.b16 %v432
    %v1451 = vunpack.c.l.b16 %v433
    %v1452 = vunpack.c.h.b16 %v433
    %v1453 = vunpack.c.l.b16 %v434
    %v1454 = vunpack.c.h.b16 %v434
    %v1455 = vunpack.c.l.b16 %v435
    %v1456 = vunpack.c.h.b16 %v435
    %v1457 = vunpack.c.l.b16 %v436
    %v1458 = vunpack.c.h.b16 %v436
    %v1459 = vunpack.c.l.b16 %v437
    %v1460 = vunpack.c.h.b16 %v437
    %v1461 = vunpack.c.l.b16 %v438
    %v1462 = vunpack.c.h.b16 %v438
    %v1463 = vunpack.c.l.b16 %v439
    %v1464 = vunpack.c.h.b16 %v439
    %v1465 = vunpack.c.l.b16 %v440
    %v1466 = vunpack.c.h.b16 %v440
    %v1467 = vunpack.c.l.b16 %v441
    %v1468 = vunpack.c.h.b16 %v441
    %v1469 = vunpack.c.l.b16 %v442
    %v1470 = vunpack.c.h.b16 %v442
    %v1471 = vunpack.c.l.b16 %v443
    %v1472 = vunpack.c.h.b16 %v443
    %v1473 = vunpack.c.l.b16 %v444
    %v1474 = vunpack.c.l.b16 %v445
    %v1475 = vunpack.c.h.b16 %v445
    %v1476 = vunpack.c.l.b16 %v446
    %v1477 = vunpack.c.h.b16 %v446
    %v1478 = vunpack.c.l.b16 %v447
    %v1479 = vunpack.c.h.b16 %v447
    %v1480 = vunpack.c.l.b16 %v448
    %v1481 = vunpack.c.h.b16 %v448
    %v1482 = vunpack.c.l.b16 %v449
    %v1483 = vunpack.c.h.b16 %v449
    %v1484 = vunpack.c.l.b16 %v450
    %v1485 = vunpack.c.h.b16 %v450
    %v1486 = vunpack.c.l.b16 %v451
    %v1487 = vunpack.c.h.b16 %v451
    %v1488 = vunpack.c.l.b16 %v452
    %v1489 = vunpack.c.h.b16 %v452
    %v1490 = vunpack.c.l.b16 %v453
    %v1491 = vunpack.c.h.b16 %v453
    %v1492 = vunpack.c.l.b16 %v454
    %v1493 = vunpack.c.h.b16 %v454
    %v1494 = vunpack.c.l.b16 %v455
    %v1495 = vunpack.c.h.b16 %v455
    %v1496 = vunpack.c.l.b16 %v456
    %v1497 = vunpack.c.h.b16 %v456
    %v1498 = vunpack.c.l.b16 %v457
    %v1499 = vunpack.c.h.b16 %v457
    %v1500 = vunpack.c.l.b16 %v458
    %v1501 = vunpack.c.l.b16 %v459
    %v1502 = vunpack.c.h.b16 %v459
    %v1503 = vunpack.c.l.b16 %v460
    %v1504 = vunpack.c.h.b16 %v460
    %v1505 = vunpack.c.l.b16 %v461
    %v1506 = vunpack.c.h.b16 %v461
    %v1507 = vunpack.c.l.b16 %v462
    %v1508 = vunpack.c.h.b16 %v462
    %v1509 = vunpack.c.l.b16 %v463
    %v1510 = vunpack.c.h.b16 %v463
    %v1511 = vunpack.c.l.b16 %v464
    %v1512 = vunpack.c.h.b16 %v464
    %v1513 = vunpack.c.l.b16 %v465
    %v1514 = vunpack.c.h.b16 %v465
    %v1515 = vunpack.c.l.b16 %v466
    %v1516 = vunpack.c.h.b16 %v466
    %v1517 = vunpack.c.l.b16 %v467
    %v1518 = vunpack.c.h.b16 %v467
    %v1519 = vunpack.c.l.b16 %v468
    %v1520 = vunpack.c.h.b16 %v468
    %v1521 = vunpack.c.l.b16 %v469
    %v1522 = vunpack.c.h.b16 %v469
    %v1523 = vunpack.c.l.b16 %v470
    %v1524 = vunpack.c.h.b16 %v470
    %v1525 = vunpack.c.l.b16 %v471
    %v1526 = vunpack.c.h.b16 %v471
    %v1527 = vunpack.c.l.b16 %v472
    %v1528 = vunpack.c.l.b16 %v473
    %v1529 = vunpack.c.h.b16 %v473
    %v1530 = vunpack.c.l.b16 %v474
    %v1531 = vunpack.c.h.b16 %v474
    %v1532 = vunpack.c.l.b16 %v475
    %v1533 = vunpack.c.h.b16 %v475
    %v1534 = vunpack.c.l.b16 %v476
    %v1535 = vunpack.c.h.b16 %v476
    %v1536 = vunpack.c.l.b16 %v477
    %v1537 = vunpack.c.h.b16 %v477
    %v1538 = vunpack.c.l.b16 %v478
    %v1539 = vunpack.c.h.b16 %v478
    %v1540 = vunpack.c.l.b16 %v479
    %v1541 = vunpack.c.h.b16 %v479
    %v1542 = vunpack.c.l.b16 %v480
    %v1543 = vunpack.c.h.b16 %v480
    %v1544 = vunpack.c.l.b16 %v481
    %v1545 = vunpack.c.h.b16 %v481
    %v1546 = vunpack.c.l.b16 %v482
    %v1547 = vunpack.c.h.b16 %v482
    %v1548 = vunpack.c.l.b16 %v483
    %v1549 = vunpack.c.h.b16 %v483
    %v1550 = vunpack.c.l.b16 %v484
    %v1551 = vunpack.c.h.b16 %v484
    %v1552 = vunpack.c.l.b16 %v485
    %v1553 = vunpack.c.h.b16 %v485
    %v1554 = vunpack.c.l.b16 %v486
    %v1555 = vunpack.c.l.b16 %v487
    %v1556 = vunpack.c.h.b16 %v487
    %v1557 = vunpack.c.l.b16 %v488
    %v1558 = vunpack.c.h.b16 %v488
    %v1559 = vunpack.c.l.b16 %v489
    %v1560 = vunpack.c.h.b16 %v489
    %v1561 = vunpack.c.l.b16 %v490
    %v1562 = vunpack.c.h.b16 %v490
    %v1563 = vunpack.c.l.b16 %v491
    %v1564 = vunpack.c.h.b16 %v491
    %v1565 = vunpack.c.l.b16 %v492
    %v1566 = vunpack.c.h.b16 %v492
    %v1567 = vunpack.c.l.b16 %v493
    %v1568 = vunpack.c.h.b16 %v493
    %v1569 = vunpack.c.l.b16 %v494
    %v1570 = vunpack.c.h.b16 %v494
    %v1571 = vunpack.c.l.b16 %v495
    %v1572 = vunpack.c.h.b16 %v495
    %v1573 = vunpack.c.l.b16 %v496
    %v1574 = vunpack.c.h.b16 %v496
    %v1575 = vunpack.c.l.b16 %v497
    %v1576 = vunpack.c.h.b16 %v497
    %v1577 = vunpack.c.l.b16 %v498
    %v1578 = vunpack.c.h.b16 %v498
    %v1579 = vunpack.c.l.b16 %v499
    %v1580 = vunpack.c.h.b16 %v499
    %v1581 = vunpack.c.l.b16 %v500
    %v1582 = vpack.c.b16 %v1069, %v1042
    %v1583 = vpack.c.b16 %v1070, %v1043
    %v1584 = vpack.c.b16 %v1071, %v1044
    %v1585 = vpack.c.b16 %v1072, %v1045
    %v1586 = vpack.c.b16 %v1073, %v1046
    %v1587 = vpack.c.b16 %v1074, %v1047
    %v1588 = vpack.c.b16 %v1075, %v1048
    %v1589 = vpack.c.b16 %v1076, %v1049
    %v1590 = vpack.c.b16 %v1077, %v1050
    %v1591 = vpack.c.b16 %v1078, %v1051
    %v1592 = vpack.c.b16 %v1079, %v1052
    %v1593 = vpack.c.b16 %v1080, %v1053
    %v1594 = vpack.c.b16 %v1081, %v1054
    %v1595 = vpack.c.b16 %v1082, %v1055
    %v1596 = vpack.c.b16 %v1083, %v1056
    %v1597 = vpack.c.b16 %v1084, %v1057
    %v1598 = vpack.c.b16 %v1085, %v1058
    %v1599 = vpack.c.b16 %v1086, %v1059
    %v1600 = vpack.c.b16 %v1087, %v1060
    %v1601 = vpack.c.b16 %v1088, %v1061
    %v1602 = vpack.c.b16 %v1089, %v1062
    %v1603 = vpack.c.b16 %v1090, %v1063
    %v1604 = vpack.c.b16 %v1091, %v1064
    %v1605 = vpack.c.b16 %v1092, %v1065
    %v1606 = vpack.c.b16 %v1093, %v1066
    %v1607 = vpack.c.b16 %v1094, %v1067
    %v1608 = vpack.c.b16 %v1095, %v1068
    %v1609 = vpack.c.b16 %v1123, %v1096
    %v1610 = vpack.c.b16 %v1124, %v1097
    %v1611 = vpack.c.b16 %v1125, %v1098
    %v1612 = vpack.c.b16 %v1126, %v1099
    %v1613 = vpack.c.b16 %v1127, %v1100
    %v1614 = vpack.c.b16 %v1128, %v1101
    %v1615 = vpack.c.b16 %v1129, %v1102
    %v1616 = vpack.c.b16 %v1130, %v1103
    %v1617 = vpack.c.b16 %v1131, %v1104
    %v1618 = vpack.c.b16 %v1132, %v1105
    %v1619 = vpack.c.b16 %v1133, %v1106
    %v1620 = vpack.c.b16 %v1134, %v1107
    %v1621 = vpack.c.b16 %v1135, %v1108
    %v1622 = vpack.c.b16 %v1136, %v1109
    %v1623 = vpack.c.b16 %v1137, %v1110
    %v1624 = vpack.c.b16 %v1138, %v1111
    %v1625 = vpack.c.b16 %v1139, %v1112
    %v1626 = vpack.c.b16 %v1140, %v1113
    %v1627 = vpack.c.b16 %v1141, %v1114
    %v1628 = vpack.c.b16 %v1142, %v1115
    %v1629 = vpack.c.b16 %v1143, %v1116
    %v1630 = vpack.c.b16 %v1144, %v1117
    %v1631 = vpack.c.b16 %v1145, %v1118
    %v1632 = vpack.c.b16 %v1146, %v1119
    %v1633 = vpack.c.b16 %v1147, %v1120
    %v1634 = vpack.c.b16 %v1148, %v1121
    %v1635 = vpack.c.b16 %v1149, %v1122
    %v1636 = vpack.c.b16 %v1177, %v1150
    %v1637 = vpack.c.b16 %v1178, %v1151
    %v1638 = vpack.c.b16 %v1179, %v1152
    %v1639 = vpack.c.b16 %v1180, %v1153
    %v1640 = vpack.c.b16 %v1181, %v1154
    %v1641 = vpack.c.b16 %v1182, %v1155
    %v1642 = vpack.c.b16 %v1183, %v1156
    %v1643 = vpack.c.b16 %v1184, %v1157
    %v1644 = vpack.c.b16 %v1185, %v1158
    %v1645 = vpack.c.b16 %v1186, %v1159
    %v1646 = vpack.c.b16 %v1187, %v1160
    %v1647 = vpack.c.b16 %v1188, %v1161
    %v1648 = vpack.c.b16 %v1189, %v1162
    %v1649 = vpack.c.b16 %v1190, %v1163
    %v1650 = vpack.c.b16 %v1191, %v1164
    %v1651 = vpack.c.b16 %v1192, %v1165
    %v1652 = vpack.c.b16 %v1193, %v1166
    %v1653 = vpack.c.b16 %v1194, %v1167
    %v1654 = vpack.c.b16 %v1195, %v1168
    %v1655 = vpack.c.b16 %v1196, %v1169
    %v1656 = vpack.c.b16 %v1197, %v1170
    %v1657 = vpack.c.b16 %v1198, %v1171
    %v1658 = vpack.c.b16 %v1199, %v1172
    %v1659 = vpack.c.b16 %v1200, %v1173
    %v1660 = vpack.c.b16 %v1201, %v1174
    %v1661 = vpack.c.b16 %v1202, %v1175
    %v1662 = vpack.c.b16 %v1203, %v1176
    %v1663 = vpack.c.b16 %v1231, %v1204
    %v1664 = vpack.c.b16 %v1232, %v1205
    %v1665 = vpack.c.b16 %v1233, %v1206
    %v1666 = vpack.c.b16 %v1234, %v1207
    %v1667 = vpack.c.b16 %v1235, %v1208
    %v1668 = vpack.c.b16 %v1236, %v1209
    %v1669 = vpack.c.b16 %v1237, %v1210
    %v1670 = vpack.c.b16 %v1238, %v1211
    %v1671 = vpack.c.b16 %v1239, %v1212
    %v1672 = vpack.c.b16 %v1240, %v1213
    %v1673 = vpack.c.b16 %v1241, %v1214
    %v1674 = vpack.c.b16 %v1242, %v1215
    %v1675 = vpack.c.b16 %v1243, %v1216
    %v1676 = vpack.c.b16 %v1244, %v1217
    %v1677 = vpack.c.b16 %v1245, %v1218
    %v1678 = vpack.c.b16 %v1246, %v1219
    %v1679 = vpack.c.b16 %v1247, %v1220
    %v1680 = vpack.c.b16 %v1248, %v1221
    %v1681 = vpack.c.b16 %v1249, %v1222
    %v1682 = vpack.c.b16 %v1250, %v1223
    %v1683 = vpack.c.b16 %v1251, %v1224
    %v1684 = vpack.c.b16 %v1252, %v1225
    %v1685 = vpack.c.b16 %v1253, %v1226
    %v1686 = vpack.c.b16 %v1254, %v1227
    %v1687 = vpack.c.b16 %v1255, %v1228
    %v1688 = vpack.c.b16 %v1256, %v1229
    %v1689 = vpack.c.b16 %v1257, %v1230
    %v1690 = vpack.c.b16 %v1285, %v1258
    %v1691 = vpack.c.b16 %v1286, %v1259
    %v1692 = vpack.c.b16 %v1287, %v1260
    %v1693 = vpack.c.b16 %v1288, %v1261
    %v1694 = vpack.c.b16 %v1289, %v1262
    %v1695 = vpack.c.b16 %v1290, %v1263
    %v1696 = vpack.c.b16 %v1291, %v1264
    %v1697 = vpack.c.b16 %v1292, %v1265
    %v1698 = vpack.c.b16 %v1293, %v1266
    %v1699 = vpack.c.b16 %v1294, %v1267
    %v1700 = vpack.c.b16 %v1295, %v1268
    %v1701 = vpack.c.b16 %v1296, %v1269
    %v1702 = vpack.c.b16 %v1297, %v1270
    %v1703 = vpack.c.b16 %v1298, %v1271
    %v1704 = vpack.c.b16 %v1299, %v1272
    %v1705 = vpack.c.b16 %v1300, %v1273
    %v1706 = vpack.c.b16 %v1301, %v1274
    %v1707 = vpack.c.b16 %v1302, %v1275
    %v1708 = vpack.c.b16 %v1303, %v1276
    %v1709 = vpack.c.b16 %v1304, %v1277
    %v1710 = vpack.c.b16 %v1305, %v1278
    %v1711 = vpack.c.b16 %v1306, %v1279
    %v1712 = vpack.c.b16 %v1307, %v1280
    %v1713 = vpack.c.b16 %v1308, %v1281
    %v1714 = vpack.c.b16 %v1309, %v1282
    %v1715 = vpack.c.b16 %v1310, %v1283
    %v1716 = vpack.c.b16 %v1311, %v1284
    %v1717 = vpack.c.b16 %v1339, %v1312
    %v1718 = vpack.c.b16 %v1340, %v1313
    %v1719 = vpack.c.b16 %v1341, %v1314
    %v1720 = vpack.c.b16 %v1342, %v1315
    %v1721 = vpack.c.b16 %v1343, %v1316
    %v1722 = vpack.c.b16 %v1344, %v1317
    %v1723 = vpack.c.b16 %v1345, %v1318
    %v1724 = vpack.c.b16 %v1346, %v1319
    %v1725 = vpack.c.b16 %v1347, %v1320
    %v1726 = vpack.c.b16 %v1348, %v1321
    %v1727 = vpack.c.b16 %v1349, %v1322
    %v1728 = vpack.c.b16 %v1350, %v1323
    %v1729 = vpack.c.b16 %v1351, %v1324
    %v1730 = vpack.c.b16 %v1352, %v1325
    %v1731 = vpack.c.b16 %v1353, %v1326
    %v1732 = vpack.c.b16 %v1354, %v1327
    %v1733 = vpack.c.b16 %v1355, %v1328
    %v1734 = vpack.c.b16 %v1356, %v1329
    %v1735 = vpack.c.b16 %v1357, %v1330
    %v1736 = vpack.c.b16 %v1358, %v1331
    %v1737 = vpack.c.b16 %v1359, %v1332
    %v1738 = vpack.c.b16 %v1360, %v1333
    %v1739 = vpack.c.b16 %v1361, %v1334
    %v1740 = vpack.c.b16 %v1362, %v1335
    %v1741 = vpack.c.b16 %v1363, %v1336
    %v1742 = vpack.c.b16 %v1364, %v1337
    %v1743 = vpack.c.b16 %v1365, %v1338
    %v1744 = vpack.c.b16 %v1393, %v1366
    %v1745 = vpack.c.b16 %v1394, %v1367
    %v1746 = vpack.c.b16 %v1395, %v1368
    %v1747 = vpack.c.b16 %v1396, %v1369
    %v1748 = vpack.c.b16 %v1397, %v1370
    %v1749 = vpack.c.b16 %v1398, %v1371
    %v1750 = vpack.c.b16 %v1399, %v1372
    %v1751 = vpack.c.b16 %v1400, %v1373
    %v1752 = vpack.c.b16 %v1401, %v1374
    %v1753 = vpack.c.b16 %v1402, %v1375
    %v1754 = vpack.c.b16 %v1403, %v1376
    %v1755 = vpack.c.b16 %v1404, %v1377
    %v1756 = vpack.c.b16 %v1405, %v1378
    %v1757 = vpack.c.b16 %v1406, %v1379
    %v1758 = vpack.c.b16 %v1407, %v1380
    %v1759 = vpack.c.b16 %v1408, %v1381
    %v1760 = vpack.c.b16 %v1409, %v1382
    %v1761 = vpack.c.b16 %v1410, %v1383
    %v1762 = vpack.c.b16 %v1411, %v1384
    %v1763 = vpack.c.b16 %v1412, %v1385
    %v1764 = vpack.c.b16 %v1413, %v1386
    %v1765 = vpack.c.b16 %v1414, %v1387
    %v1766 = vpack.c.b16 %v1415, %v1388
    %v1767 = vpack.c.b16 %v1416, %v1389
    %v1768 = vpack.c.b16 %v1417, %v1390
    %v1769 = vpack.c.b16 %v1418, %v1391
    %v1770 = vpack.c.b16 %v1419, %v1392
    %v1771 = vpack.c.b16 %v1447, %v1420
    %v1772 = vpack.c.b16 %v1448, %v1421
    %v1773 = vpack.c.b16 %v1449, %v1422
    %v1774 = vpack.c.b16 %v1450, %v1423
    %v1775 = vpack.c.b16 %v1451, %v1424
    %v1776 = vpack.c.b16 %v1452, %v1425
    %v1777 = vpack.c.b16 %v1453, %v1426
    %v1778 = vpack.c.b16 %v1454, %v1427
    %v1779 = vpack.c.b16 %v1455, %v1428
    %v1780 = vpack.c.b16 %v1456, %v1429
    %v1781 = vpack.c.b16 %v1457, %v1430
    %v1782 = vpack.c.b16 %v1458, %v1431
    %v1783 = vpack.c.b16 %v1459, %v1432
    %v1784 = vpack.c.b16 %v1460, %v1433
    %v1785 = vpack.c.b16 %v1461, %v1434
    %v1786 = vpack.c.b16 %v1462, %v1435
    %v1787 = vpack.c.b16 %v1463, %v1436
    %v1788 = vpack.c.b16 %v1464, %v1437
    %v1789 = vpack.c.b16 %v1465, %v1438
    %v1790 = vpack.c.b16 %v1466, %v1439
    %v1791 = vpack.c.b16 %v1467, %v1440
    %v1792 = vpack.c.b16 %v1468, %v1441
    %v1793 = vpack.c.b16 %v1469, %v1442
    %v1794 = vpack.c.b16 %v1470, %v1443
    %v1795 = vpack.c.b16 %v1471, %v1444
    %v1796 = vpack.c.b16 %v1472, %v1445
    %v1797 = vpack.c.b16 %v1473, %v1446
    %v1798 = vpack.c.b16 %v1501, %v1474
    %v1799 = vpack.c.b16 %v1502, %v1475
    %v1800 = vpack.c.b16 %v1503, %v1476
    %v1801 = vpack.c.b16 %v1504, %v1477
    %v1802 = vpack.c.b16 %v1505, %v1478
    %v1803 = vpack.c.b16 %v1506, %v1479
    %v1804 = vpack.c.b16 %v1507, %v1480
    %v1805 = vpack.c.b16 %v1508, %v1481
    %v1806 = vpack.c.b16 %v1509, %v1482
    %v1807 = vpack.c.b16 %v1510, %v1483
    %v1808 = vpack.c.b16 %v1511, %v1484
    %v1809 = vpack.c.b16 %v1512, %v1485
    %v1810 = vpack.c.b16 %v1513, %v1486
    %v1811 = vpack.c.b16 %v1514, %v1487
    %v1812 = vpack.c.b16 %v1515, %v1488
    %v1813 = vpack.c.b16 %v1516, %v1489
    %v1814 = vpack.c.b16 %v1517, %v1490
    %v1815 = vpack.c.b16 %v1518, %v1491
    %v1816 = vpack.c.b16 %v1519, %v1492
    %v1817 = vpack.c.b16 %v1520, %v1493
    %v1818 = vpack.c.b16 %v1521, %v1494
    %v1819 = vpack.c.b16 %v1522, %v1495
    %v1820 = vpack.c.b16 %v1523, %v1496
    %v1821 = vpack.c.b16 %v1524, %v1497
    %v1822 = vpack.c.b16 %v1525, %v1498
    %v1823 = vpack.c.b16 %v1526, %v1499
    %v1824 = vpack.c.b16 %v1527, %v1500
    %v1825 = vpack.c.b16 %v1555, %v1528
    %v1826 = vpack.c.b16 %v1556, %v1529
    %v1827 = vpack.c.b16 %v1557, %v1530
    %v1828 = vpack.c.b16 %v1558, %v1531
    %v1829 = vpack.c.b16 %v1559, %v1532
    %v1830 = vpack.c.b16 %v1560, %v1533
    %v1831 = vpack.c.b16 %v1561, %v1534
    %v1832 = vpack.c.b16 %v1562, %v1535
    %v1833 = vpack.c.b16 %v1563, %v1536
    %v1834 = vpack.c.b16 %v1564, %v1537
    %v1835 = vpack.c.b16 %v1565, %v1538
    %v1836 = vpack.c.b16 %v1566, %v1539
    %v1837 = vpack.c.b16 %v1567, %v1540
    %v1838 = vpack.c.b16 %v1568, %v1541
    %v1839 = vpack.c.b16 %v1569, %v1542
    %v1840 = vpack.c.b16 %v1570, %v1543
    %v1841 = vpack.c.b16 %v1571, %v1544
    %v1842 = vpack.c.b16 %v1572, %v1545
    %v1843 = vpack.c.b16 %v1573, %v1546
    %v1844 = vpack.c.b16 %v1574, %v1547
    %v1845 = vpack.c.b16 %v1575, %v1548
    %v1846 = vpack.c.b16 %v1576, %v1549
    %v1847 = vpack.c.b16 %v1577, %v1550
    %v1848 = vpack.c.b16 %v1578, %v1551
    %v1849 = vpack.c.b16 %v1579, %v1552
    %v1850 = vpack.c.b16 %v1580, %v1553
    %v1851 = vpack.c.b16 %v1581, %v1554
    %vm2122 = vcmask 261120
    %v2124 = vsel %vm2122, %v220, 0
    %2126 = vmatprep.subr.bf16.mxu0 %v1583
    %2127 = vmatpush1.bf16.msra.mxu0 %v1582
    %2128 = vmatprep.subr.bf16.mxu0 %v1610
    %2129 = vmatpush1.bf16.msra.mxu0 %v1609
    %2130 = vmatprep.subr.bf16.mxu0 %v1637
    %2131 = vmatpush1.bf16.msra.mxu0 %v1636
    %2132 = vmatprep.subr.bf16.mxu0 %v1664
    %2133 = vmatpush1.bf16.msra.mxu0 %v1663
    %2134 = vmatprep.subr.bf16.mxu0 %v1691
    %2135 = vmatpush1.bf16.msra.mxu0 %v1690
    %2136 = vmatprep.subr.bf16.mxu0 %v1718
    %2137 = vmatpush1.bf16.msra.mxu0 %v1717
    %2138 = vmatprep.subr.bf16.mxu0 %v1745
    %2139 = vmatpush1.bf16.msra.mxu0 %v1744
    %2140 = vmatprep.subr.bf16.mxu0 %v1772
    %2141 = vmatpush1.bf16.msra.mxu0 %v1771
    %2142 = vmatprep.subr.bf16.mxu0 %v1799
    %2143 = vmatpush1.bf16.msra.mxu0 %v1798
    %2144 = vmatprep.subr.bf16.mxu0 %v1826
    %2145 = vmatpush1.bf16.msra.mxu0 %v1825
    %2146 = vmatprep.subr.bf16.mxu0 0
    %2147 = vmatpush1.bf16.msra.mxu0 0
    %2148 = vmatprep.subr.bf16.mxu0 0
    %2149 = vmatpush1.bf16.msra.mxu0 0
    %2150 = vmatprep.subr.bf16.mxu0 0
    %2151 = vmatpush1.bf16.msra.mxu0 0
    %2152 = vmatprep.subr.bf16.mxu0 0
    %2153 = vmatpush1.bf16.msra.mxu0 0
    %2154 = vmatprep.subr.bf16.mxu0 0
    %2155 = vmatpush1.bf16.msra.mxu0 0
    %2156 = vmatprep.subr.bf16.mxu0 0
    %2157 = vmatpush1.bf16.msra.mxu0 0
    %2158 = vmatprep.mubr.bf16.mxu0 %v2124
    %2159 = vmatmul.mubr.bf16.gmra.mrb[0].mxu0 %v219
    %v2160 = vpop.f32.mrb[0].mxu0
    %v2161 = vadd.f32 %v657, %v2160
    %v2162 = vpop.f32.mrb[0].mxu0
    %v2163 = vadd.f32 %v661, %v2162
    %v2164 = vpop.f32.mrb[0].mxu0
    %v2165 = vpop.f32.mrb[0].mxu0
    %2166 = vdwg.mxu0
    %2167 = vmatprep.subr.bf16.mxu0 %v1585
    %2168 = vmatpush1.bf16.msra.mxu0 %v1584
    %2169 = vmatprep.subr.bf16.mxu0 %v1612
    %2170 = vmatpush1.bf16.msra.mxu0 %v1611
    %2171 = vmatprep.subr.bf16.mxu0 %v1639
    %2172 = vmatpush1.bf16.msra.mxu0 %v1638
    %2173 = vmatprep.subr.bf16.mxu0 %v1666
    %2174 = vmatpush1.bf16.msra.mxu0 %v1665
    %2175 = vmatprep.subr.bf16.mxu0 %v1693
    %2176 = vmatpush1.bf16.msra.mxu0 %v1692
    %2177 = vmatprep.subr.bf16.mxu0 %v1720
    %2178 = vmatpush1.bf16.msra.mxu0 %v1719
    %2179 = vmatprep.subr.bf16.mxu0 %v1747
    %2180 = vmatpush1.bf16.msra.mxu0 %v1746
    %2181 = vmatprep.subr.bf16.mxu0 %v1774
    %2182 = vmatpush1.bf16.msra.mxu0 %v1773
    %2183 = vmatprep.subr.bf16.mxu0 %v1801
    %2184 = vmatpush1.bf16.msra.mxu0 %v1800
    %2185 = vmatprep.subr.bf16.mxu0 %v1828
    %2186 = vmatpush1.bf16.msra.mxu0 %v1827
    %2187 = vmatprep.subr.bf16.mxu0 0
    %2188 = vmatpush1.bf16.msra.mxu0 0
    %2189 = vmatprep.subr.bf16.mxu0 0
    %2190 = vmatpush1.bf16.msra.mxu0 0
    %2191 = vmatprep.subr.bf16.mxu0 0
    %2192 = vmatpush1.bf16.msra.mxu0 0
    %2193 = vmatprep.subr.bf16.mxu0 0
    %2194 = vmatpush1.bf16.msra.mxu0 0
    %2195 = vmatprep.subr.bf16.mxu0 0
    %2196 = vmatpush1.bf16.msra.mxu0 0
    %2197 = vmatprep.subr.bf16.mxu0 0
    %2198 = vmatpush1.bf16.msra.mxu0 0
    %2199 = vmatprep.mubr.bf16.mxu0 %v2124
    %2200 = vmatmul.mubr.bf16.gmra.mrb[0].mxu0 %v219
    %v2201 = vpop.f32.mrb[0].mxu0
    %v2202 = vadd.f32 %v665, %v2201
    %v2203 = vpop.f32.mrb[0].mxu0
    %v2204 = vadd.f32 %v669, %v2203
    %v2205 = vpop.f32.mrb[0].mxu0
    %v2206 = vpop.f32.mrb[0].mxu0
    %2207 = vdwg.mxu0
    %2208 = vmatprep.subr.bf16.mxu0 %v1587
    %2209 = vmatpush1.bf16.msra.mxu0 %v1586
    %2210 = vmatprep.subr.bf16.mxu0 %v1614
    %2211 = vmatpush1.bf16.msra.mxu0 %v1613
    %2212 = vmatprep.subr.bf16.mxu0 %v1641
    %2213 = vmatpush1.bf16.msra.mxu0 %v1640
    %2214 = vmatprep.subr.bf16.mxu0 %v1668
    %2215 = vmatpush1.bf16.msra.mxu0 %v1667
    %2216 = vmatprep.subr.bf16.mxu0 %v1695
    %2217 = vmatpush1.bf16.msra.mxu0 %v1694
    %2218 = vmatprep.subr.bf16.mxu0 %v1722
    %2219 = vmatpush1.bf16.msra.mxu0 %v1721
    %2220 = vmatprep.subr.bf16.mxu0 %v1749
    %2221 = vmatpush1.bf16.msra.mxu0 %v1748
    %2222 = vmatprep.subr.bf16.mxu0 %v1776
    %2223 = vmatpush1.bf16.msra.mxu0 %v1775
    %2224 = vmatprep.subr.bf16.mxu0 %v1803
    %2225 = vmatpush1.bf16.msra.mxu0 %v1802
    %2226 = vmatprep.subr.bf16.mxu0 %v1830
    %2227 = vmatpush1.bf16.msra.mxu0 %v1829
    %2228 = vmatprep.subr.bf16.mxu0 0
    %2229 = vmatpush1.bf16.msra.mxu0 0
    %2230 = vmatprep.subr.bf16.mxu0 0
    %2231 = vmatpush1.bf16.msra.mxu0 0
    %2232 = vmatprep.subr.bf16.mxu0 0
    %2233 = vmatpush1.bf16.msra.mxu0 0
    %2234 = vmatprep.subr.bf16.mxu0 0
    %2235 = vmatpush1.bf16.msra.mxu0 0
    %2236 = vmatprep.subr.bf16.mxu0 0
    %2237 = vmatpush1.bf16.msra.mxu0 0
    %2238 = vmatprep.subr.bf16.mxu0 0
    %2239 = vmatpush1.bf16.msra.mxu0 0
    %2240 = vmatprep.mubr.bf16.mxu0 %v2124
    %2241 = vmatmul.mubr.bf16.gmra.mrb[0].mxu0 %v219
    %v2242 = vpop.f32.mrb[0].mxu0
    %v2243 = vadd.f32 %v673, %v2242
    %v2244 = vpop.f32.mrb[0].mxu0
    %v2245 = vadd.f32 %v677, %v2244
    %v2246 = vpop.f32.mrb[0].mxu0
    %v2247 = vpop.f32.mrb[0].mxu0
    %2248 = vdwg.mxu0
    %2249 = vmatprep.subr.bf16.mxu0 %v1589
    %2250 = vmatpush1.bf16.msra.mxu0 %v1588
    %2251 = vmatprep.subr.bf16.mxu0 %v1616
    %2252 = vmatpush1.bf16.msra.mxu0 %v1615
    %2253 = vmatprep.subr.bf16.mxu0 %v1643
    %2254 = vmatpush1.bf16.msra.mxu0 %v1642
    %2255 = vmatprep.subr.bf16.mxu0 %v1670
    %2256 = vmatpush1.bf16.msra.mxu0 %v1669
    %2257 = vmatprep.subr.bf16.mxu0 %v1697
    %2258 = vmatpush1.bf16.msra.mxu0 %v1696
    %2259 = vmatprep.subr.bf16.mxu0 %v1724
    %2260 = vmatpush1.bf16.msra.mxu0 %v1723
    %2261 = vmatprep.subr.bf16.mxu0 %v1751
    %2262 = vmatpush1.bf16.msra.mxu0 %v1750
    %2263 = vmatprep.subr.bf16.mxu0 %v1778
    %2264 = vmatpush1.bf16.msra.mxu0 %v1777
    %2265 = vmatprep.subr.bf16.mxu0 %v1805
    %2266 = vmatpush1.bf16.msra.mxu0 %v1804
    %2267 = vmatprep.subr.bf16.mxu0 %v1832
    %2268 = vmatpush1.bf16.msra.mxu0 %v1831
    %2269 = vmatprep.subr.bf16.mxu0 0
    %2270 = vmatpush1.bf16.msra.mxu0 0
    %2271 = vmatprep.subr.bf16.mxu0 0
    %2272 = vmatpush1.bf16.msra.mxu0 0
    %2273 = vmatprep.subr.bf16.mxu0 0
    %2274 = vmatpush1.bf16.msra.mxu0 0
    %2275 = vmatprep.subr.bf16.mxu0 0
    %2276 = vmatpush1.bf16.msra.mxu0 0
    %2277 = vmatprep.subr.bf16.mxu0 0
    %2278 = vmatpush1.bf16.msra.mxu0 0
    %2279 = vmatprep.subr.bf16.mxu0 0
    %2280 = vmatpush1.bf16.msra.mxu0 0
    %2281 = vmatprep.mubr.bf16.mxu0 %v2124
    %2282 = vmatmul.mubr.bf16.gmra.mrb[0].mxu0 %v219
    %v2283 = vpop.f32.mrb[0].mxu0
    %v2284 = vadd.f32 %v681, %v2283
    %v2285 = vpop.f32.mrb[0].mxu0
    %v2286 = vadd.f32 %v685, %v2285
    %v2287 = vpop.f32.mrb[0].mxu0
    %v2288 = vpop.f32.mrb[0].mxu0
    %2289 = vdwg.mxu0
    %2290 = vmatprep.subr.bf16.mxu0 %v1591
    %2291 = vmatpush1.bf16.msra.mxu0 %v1590
    %2292 = vmatprep.subr.bf16.mxu0 %v1618
    %2293 = vmatpush1.bf16.msra.mxu0 %v1617
    %2294 = vmatprep.subr.bf16.mxu0 %v1645
    %2295 = vmatpush1.bf16.msra.mxu0 %v1644
    %2296 = vmatprep.subr.bf16.mxu0 %v1672
    %2297 = vmatpush1.bf16.msra.mxu0 %v1671
    %2298 = vmatprep.subr.bf16.mxu0 %v1699
    %2299 = vmatpush1.bf16.msra.mxu0 %v1698
    %2300 = vmatprep.subr.bf16.mxu0 %v1726
    %2301 = vmatpush1.bf16.msra.mxu0 %v1725
    %2302 = vmatprep.subr.bf16.mxu0 %v1753
    %2303 = vmatpush1.bf16.msra.mxu0 %v1752
    %2304 = vmatprep.subr.bf16.mxu0 %v1780
    %2305 = vmatpush1.bf16.msra.mxu0 %v1779
    %2306 = vmatprep.subr.bf16.mxu0 %v1807
    %2307 = vmatpush1.bf16.msra.mxu0 %v1806
    %2308 = vmatprep.subr.bf16.mxu0 %v1834
    %2309 = vmatpush1.bf16.msra.mxu0 %v1833
    %2310 = vmatprep.subr.bf16.mxu0 0
    %2311 = vmatpush1.bf16.msra.mxu0 0
    %2312 = vmatprep.subr.bf16.mxu0 0
    %2313 = vmatpush1.bf16.msra.mxu0 0
    %2314 = vmatprep.subr.bf16.mxu0 0
    %2315 = vmatpush1.bf16.msra.mxu0 0
    %2316 = vmatprep.subr.bf16.mxu0 0
    %2317 = vmatpush1.bf16.msra.mxu0 0
    %2318 = vmatprep.subr.bf16.mxu0 0
    %2319 = vmatpush1.bf16.msra.mxu0 0
    %2320 = vmatprep.subr.bf16.mxu0 0
    %2321 = vmatpush1.bf16.msra.mxu0 0
    %2322 = vmatprep.mubr.bf16.mxu0 %v2124
    %2323 = vmatmul.mubr.bf16.gmra.mrb[0].mxu0 %v219
    %v2324 = vpop.f32.mrb[0].mxu0
    %v2325 = vadd.f32 %v689, %v2324
    %v2326 = vpop.f32.mrb[0].mxu0
    %v2327 = vadd.f32 %v693, %v2326
    %v2328 = vpop.f32.mrb[0].mxu0
    %v2329 = vpop.f32.mrb[0].mxu0
    %2330 = vdwg.mxu0
    %2331 = vmatprep.subr.bf16.mxu0 %v1593
    %2332 = vmatpush1.bf16.msra.mxu0 %v1592
    %2333 = vmatprep.subr.bf16.mxu0 %v1620
    %2334 = vmatpush1.bf16.msra.mxu0 %v1619
    %2335 = vmatprep.subr.bf16.mxu0 %v1647
    %2336 = vmatpush1.bf16.msra.mxu0 %v1646
    %2337 = vmatprep.subr.bf16.mxu0 %v1674
    %2338 = vmatpush1.bf16.msra.mxu0 %v1673
    %2339 = vmatprep.subr.bf16.mxu0 %v1701
    %2340 = vmatpush1.bf16.msra.mxu0 %v1700
    %2341 = vmatprep.subr.bf16.mxu0 %v1728
    %2342 = vmatpush1.bf16.msra.mxu0 %v1727
    %2343 = vmatprep.subr.bf16.mxu0 %v1755
    %2344 = vmatpush1.bf16.msra.mxu0 %v1754
    %2345 = vmatprep.subr.bf16.mxu0 %v1782
    %2346 = vmatpush1.bf16.msra.mxu0 %v1781
    %2347 = vmatprep.subr.bf16.mxu0 %v1809
    %2348 = vmatpush1.bf16.msra.mxu0 %v1808
    %2349 = vmatprep.subr.bf16.mxu0 %v1836
    %2350 = vmatpush1.bf16.msra.mxu0 %v1835
    %2351 = vmatprep.subr.bf16.mxu0 0
    %2352 = vmatpush1.bf16.msra.mxu0 0
    %2353 = vmatprep.subr.bf16.mxu0 0
    %2354 = vmatpush1.bf16.msra.mxu0 0
    %2355 = vmatprep.subr.bf16.mxu0 0
    %2356 = vmatpush1.bf16.msra.mxu0 0
    %2357 = vmatprep.subr.bf16.mxu0 0
    %2358 = vmatpush1.bf16.msra.mxu0 0
    %2359 = vmatprep.subr.bf16.mxu0 0
    %2360 = vmatpush1.bf16.msra.mxu0 0
    %2361 = vmatprep.subr.bf16.mxu0 0
    %2362 = vmatpush1.bf16.msra.mxu0 0
    %2363 = vmatprep.mubr.bf16.mxu0 %v2124
    %2364 = vmatmul.mubr.bf16.gmra.mrb[0].mxu0 %v219
    %v2365 = vpop.f32.mrb[0].mxu0
    %v2366 = vadd.f32 %v697, %v2365
    %v2367 = vpop.f32.mrb[0].mxu0
    %v2368 = vadd.f32 %v701, %v2367
    %v2369 = vpop.f32.mrb[0].mxu0
    %v2370 = vpop.f32.mrb[0].mxu0
    %2371 = vdwg.mxu0
    %2372 = vmatprep.subr.bf16.mxu0 %v1595
    %2373 = vmatpush1.bf16.msra.mxu0 %v1594
    %2374 = vmatprep.subr.bf16.mxu0 %v1622
    %2375 = vmatpush1.bf16.msra.mxu0 %v1621
    %2376 = vmatprep.subr.bf16.mxu0 %v1649
    %2377 = vmatpush1.bf16.msra.mxu0 %v1648
    %2378 = vmatprep.subr.bf16.mxu0 %v1676
    %2379 = vmatpush1.bf16.msra.mxu0 %v1675
    %2380 = vmatprep.subr.bf16.mxu0 %v1703
    %2381 = vmatpush1.bf16.msra.mxu0 %v1702
    %2382 = vmatprep.subr.bf16.mxu0 %v1730
    %2383 = vmatpush1.bf16.msra.mxu0 %v1729
    %2384 = vmatprep.subr.bf16.mxu0 %v1757
    %2385 = vmatpush1.bf16.msra.mxu0 %v1756
    %2386 = vmatprep.subr.bf16.mxu0 %v1784
    %2387 = vmatpush1.bf16.msra.mxu0 %v1783
    %2388 = vmatprep.subr.bf16.mxu0 %v1811
    %2389 = vmatpush1.bf16.msra.mxu0 %v1810
    %2390 = vmatprep.subr.bf16.mxu0 %v1838
    %2391 = vmatpush1.bf16.msra.mxu0 %v1837
    %2392 = vmatprep.subr.bf16.mxu0 0
    %2393 = vmatpush1.bf16.msra.mxu0 0
    %2394 = vmatprep.subr.bf16.mxu0 0
    %2395 = vmatpush1.bf16.msra.mxu0 0
    %2396 = vmatprep.subr.bf16.mxu0 0
    %2397 = vmatpush1.bf16.msra.mxu0 0
    %2398 = vmatprep.subr.bf16.mxu0 0
    %2399 = vmatpush1.bf16.msra.mxu0 0
    %2400 = vmatprep.subr.bf16.mxu0 0
    %2401 = vmatpush1.bf16.msra.mxu0 0
    %2402 = vmatprep.subr.bf16.mxu0 0
    %2403 = vmatpush1.bf16.msra.mxu0 0
    %2404 = vmatprep.mubr.bf16.mxu0 %v2124
    %2405 = vmatmul.mubr.bf16.gmra.mrb[0].mxu0 %v219
    %v2406 = vpop.f32.mrb[0].mxu0
    %v2407 = vadd.f32 %v705, %v2406
    %v2408 = vpop.f32.mrb[0].mxu0
    %v2409 = vadd.f32 %v709, %v2408
    %v2410 = vpop.f32.mrb[0].mxu0
    %v2411 = vpop.f32.mrb[0].mxu0
    %2412 = vdwg.mxu0
    %2413 = vmatprep.subr.bf16.mxu0 %v1597
    %2414 = vmatpush1.bf16.msra.mxu0 %v1596
    %2415 = vmatprep.subr.bf16.mxu0 %v1624
    %2416 = vmatpush1.bf16.msra.mxu0 %v1623
    %2417 = vmatprep.subr.bf16.mxu0 %v1651
    %2418 = vmatpush1.bf16.msra.mxu0 %v1650
    %2419 = vmatprep.subr.bf16.mxu0 %v1678
    %2420 = vmatpush1.bf16.msra.mxu0 %v1677
    %2421 = vmatprep.subr.bf16.mxu0 %v1705
    %2422 = vmatpush1.bf16.msra.mxu0 %v1704
    %2423 = vmatprep.subr.bf16.mxu0 %v1732
    %2424 = vmatpush1.bf16.msra.mxu0 %v1731
    %2425 = vmatprep.subr.bf16.mxu0 %v1759
    %2426 = vmatpush1.bf16.msra.mxu0 %v1758
    %2427 = vmatprep.subr.bf16.mxu0 %v1786
    %2428 = vmatpush1.bf16.msra.mxu0 %v1785
    %2429 = vmatprep.subr.bf16.mxu0 %v1813
    %2430 = vmatpush1.bf16.msra.mxu0 %v1812
    %2431 = vmatprep.subr.bf16.mxu0 %v1840
    %2432 = vmatpush1.bf16.msra.mxu0 %v1839
    %2433 = vmatprep.subr.bf16.mxu0 0
    %2434 = vmatpush1.bf16.msra.mxu0 0
    %2435 = vmatprep.subr.bf16.mxu0 0
    %2436 = vmatpush1.bf16.msra.mxu0 0
    %2437 = vmatprep.subr.bf16.mxu0 0
    %2438 = vmatpush1.bf16.msra.mxu0 0
    %2439 = vmatprep.subr.bf16.mxu0 0
    %2440 = vmatpush1.bf16.msra.mxu0 0
    %2441 = vmatprep.subr.bf16.mxu0 0
    %2442 = vmatpush1.bf16.msra.mxu0 0
    %2443 = vmatprep.subr.bf16.mxu0 0
    %2444 = vmatpush1.bf16.msra.mxu0 0
    %2445 = vmatprep.mubr.bf16.mxu0 %v2124
    %2446 = vmatmul.mubr.bf16.gmra.mrb[0].mxu0 %v219
    %v2447 = vpop.f32.mrb[0].mxu0
    %v2448 = vadd.f32 %v713, %v2447
    %v2449 = vpop.f32.mrb[0].mxu0
    %v2450 = vadd.f32 %v717, %v2449
    %v2451 = vpop.f32.mrb[0].mxu0
    %v2452 = vpop.f32.mrb[0].mxu0
    %2453 = vdwg.mxu0
    %2454 = vmatprep.subr.bf16.mxu0 %v1599
    %2455 = vmatpush1.bf16.msra.mxu0 %v1598
    %2456 = vmatprep.subr.bf16.mxu0 %v1626
    %2457 = vmatpush1.bf16.msra.mxu0 %v1625
    %2458 = vmatprep.subr.bf16.mxu0 %v1653
    %2459 = vmatpush1.bf16.msra.mxu0 %v1652
    %2460 = vmatprep.subr.bf16.mxu0 %v1680
    %2461 = vmatpush1.bf16.msra.mxu0 %v1679
    %2462 = vmatprep.subr.bf16.mxu0 %v1707
    %2463 = vmatpush1.bf16.msra.mxu0 %v1706
    %2464 = vmatprep.subr.bf16.mxu0 %v1734
    %2465 = vmatpush1.bf16.msra.mxu0 %v1733
    %2466 = vmatprep.subr.bf16.mxu0 %v1761
    %2467 = vmatpush1.bf16.msra.mxu0 %v1760
    %2468 = vmatprep.subr.bf16.mxu0 %v1788
    %2469 = vmatpush1.bf16.msra.mxu0 %v1787
    %2470 = vmatprep.subr.bf16.mxu0 %v1815
    %2471 = vmatpush1.bf16.msra.mxu0 %v1814
    %2472 = vmatprep.subr.bf16.mxu0 %v1842
    %2473 = vmatpush1.bf16.msra.mxu0 %v1841
    %2474 = vmatprep.subr.bf16.mxu0 0
    %2475 = vmatpush1.bf16.msra.mxu0 0
    %2476 = vmatprep.subr.bf16.mxu0 0
    %2477 = vmatpush1.bf16.msra.mxu0 0
    %2478 = vmatprep.subr.bf16.mxu0 0
    %2479 = vmatpush1.bf16.msra.mxu0 0
    %2480 = vmatprep.subr.bf16.mxu0 0
    %2481 = vmatpush1.bf16.msra.mxu0 0
    %2482 = vmatprep.subr.bf16.mxu0 0
    %2483 = vmatpush1.bf16.msra.mxu0 0
    %2484 = vmatprep.subr.bf16.mxu0 0
    %2485 = vmatpush1.bf16.msra.mxu0 0
    %2486 = vmatprep.mubr.bf16.mxu0 %v2124
    %2487 = vmatmul.mubr.bf16.gmra.mrb[0].mxu0 %v219
    %v2488 = vpop.f32.mrb[0].mxu0
    %v2489 = vadd.f32 %v721, %v2488
    %v2490 = vpop.f32.mrb[0].mxu0
    %v2491 = vadd.f32 %v725, %v2490
    %v2492 = vpop.f32.mrb[0].mxu0
    %v2493 = vpop.f32.mrb[0].mxu0
    %2494 = vdwg.mxu0
    %2495 = vmatprep.subr.bf16.mxu0 %v1601
    %2496 = vmatpush1.bf16.msra.mxu0 %v1600
    %2497 = vmatprep.subr.bf16.mxu0 %v1628
    %2498 = vmatpush1.bf16.msra.mxu0 %v1627
    %2499 = vmatprep.subr.bf16.mxu0 %v1655
    %2500 = vmatpush1.bf16.msra.mxu0 %v1654
    %2501 = vmatprep.subr.bf16.mxu0 %v1682
    %2502 = vmatpush1.bf16.msra.mxu0 %v1681
    %2503 = vmatprep.subr.bf16.mxu0 %v1709
    %2504 = vmatpush1.bf16.msra.mxu0 %v1708
    %2505 = vmatprep.subr.bf16.mxu0 %v1736
    %2506 = vmatpush1.bf16.msra.mxu0 %v1735
    %2507 = vmatprep.subr.bf16.mxu0 %v1763
    %2508 = vmatpush1.bf16.msra.mxu0 %v1762
    %2509 = vmatprep.subr.bf16.mxu0 %v1790
    %2510 = vmatpush1.bf16.msra.mxu0 %v1789
    %2511 = vmatprep.subr.bf16.mxu0 %v1817
    %2512 = vmatpush1.bf16.msra.mxu0 %v1816
    %2513 = vmatprep.subr.bf16.mxu0 %v1844
    %2514 = vmatpush1.bf16.msra.mxu0 %v1843
    %2515 = vmatprep.subr.bf16.mxu0 0
    %2516 = vmatpush1.bf16.msra.mxu0 0
    %2517 = vmatprep.subr.bf16.mxu0 0
    %2518 = vmatpush1.bf16.msra.mxu0 0
    %2519 = vmatprep.subr.bf16.mxu0 0
    %2520 = vmatpush1.bf16.msra.mxu0 0
    %2521 = vmatprep.subr.bf16.mxu0 0
    %2522 = vmatpush1.bf16.msra.mxu0 0
    %2523 = vmatprep.subr.bf16.mxu0 0
    %2524 = vmatpush1.bf16.msra.mxu0 0
    %2525 = vmatprep.subr.bf16.mxu0 0
    %2526 = vmatpush1.bf16.msra.mxu0 0
    %2527 = vmatprep.mubr.bf16.mxu0 %v2124
    %2528 = vmatmul.mubr.bf16.gmra.mrb[0].mxu0 %v219
    %v2529 = vpop.f32.mrb[0].mxu0
    %v2530 = vadd.f32 %v729, %v2529
    %v2531 = vpop.f32.mrb[0].mxu0
    %v2532 = vadd.f32 %v733, %v2531
    %v2533 = vpop.f32.mrb[0].mxu0
    %v2534 = vpop.f32.mrb[0].mxu0
    %2535 = vdwg.mxu0
    %2536 = vmatprep.subr.bf16.mxu0 %v1603
    %2537 = vmatpush1.bf16.msra.mxu0 %v1602
    %2538 = vmatprep.subr.bf16.mxu0 %v1630
    %2539 = vmatpush1.bf16.msra.mxu0 %v1629
    %2540 = vmatprep.subr.bf16.mxu0 %v1657
    %2541 = vmatpush1.bf16.msra.mxu0 %v1656
    %2542 = vmatprep.subr.bf16.mxu0 %v1684
    %2543 = vmatpush1.bf16.msra.mxu0 %v1683
    %2544 = vmatprep.subr.bf16.mxu0 %v1711
    %2545 = vmatpush1.bf16.msra.mxu0 %v1710
    %2546 = vmatprep.subr.bf16.mxu0 %v1738
    %2547 = vmatpush1.bf16.msra.mxu0 %v1737
    %2548 = vmatprep.subr.bf16.mxu0 %v1765
    %2549 = vmatpush1.bf16.msra.mxu0 %v1764
    %2550 = vmatprep.subr.bf16.mxu0 %v1792
    %2551 = vmatpush1.bf16.msra.mxu0 %v1791
    %2552 = vmatprep.subr.bf16.mxu0 %v1819
    %2553 = vmatpush1.bf16.msra.mxu0 %v1818
    %2554 = vmatprep.subr.bf16.mxu0 %v1846
    %2555 = vmatpush1.bf16.msra.mxu0 %v1845
    %2556 = vmatprep.subr.bf16.mxu0 0
    %2557 = vmatpush1.bf16.msra.mxu0 0
    %2558 = vmatprep.subr.bf16.mxu0 0
    %2559 = vmatpush1.bf16.msra.mxu0 0
    %2560 = vmatprep.subr.bf16.mxu0 0
    %2561 = vmatpush1.bf16.msra.mxu0 0
    %2562 = vmatprep.subr.bf16.mxu0 0
    %2563 = vmatpush1.bf16.msra.mxu0 0
    %2564 = vmatprep.subr.bf16.mxu0 0
    %2565 = vmatpush1.bf16.msra.mxu0 0
    %2566 = vmatprep.subr.bf16.mxu0 0
    %2567 = vmatpush1.bf16.msra.mxu0 0
    %2568 = vmatprep.mubr.bf16.mxu0 %v2124
    %2569 = vmatmul.mubr.bf16.gmra.mrb[0].mxu0 %v219
    %v2570 = vpop.f32.mrb[0].mxu0
    %v2571 = vadd.f32 %v737, %v2570
    %v2572 = vpop.f32.mrb[0].mxu0
    %v2573 = vadd.f32 %v741, %v2572
    %v2574 = vpop.f32.mrb[0].mxu0
    %v2575 = vpop.f32.mrb[0].mxu0
    %2576 = vdwg.mxu0
    %2577 = vmatprep.subr.bf16.mxu0 %v1605
    %2578 = vmatpush1.bf16.msra.mxu0 %v1604
    %2579 = vmatprep.subr.bf16.mxu0 %v1632
    %2580 = vmatpush1.bf16.msra.mxu0 %v1631
    %2581 = vmatprep.subr.bf16.mxu0 %v1659
    %2582 = vmatpush1.bf16.msra.mxu0 %v1658
    %2583 = vmatprep.subr.bf16.mxu0 %v1686
    %2584 = vmatpush1.bf16.msra.mxu0 %v1685
    %2585 = vmatprep.subr.bf16.mxu0 %v1713
    %2586 = vmatpush1.bf16.msra.mxu0 %v1712
    %2587 = vmatprep.subr.bf16.mxu0 %v1740
    %2588 = vmatpush1.bf16.msra.mxu0 %v1739
    %2589 = vmatprep.subr.bf16.mxu0 %v1767
    %2590 = vmatpush1.bf16.msra.mxu0 %v1766
    %2591 = vmatprep.subr.bf16.mxu0 %v1794
    %2592 = vmatpush1.bf16.msra.mxu0 %v1793
    %2593 = vmatprep.subr.bf16.mxu0 %v1821
    %2594 = vmatpush1.bf16.msra.mxu0 %v1820
    %2595 = vmatprep.subr.bf16.mxu0 %v1848
    %2596 = vmatpush1.bf16.msra.mxu0 %v1847
    %2597 = vmatprep.subr.bf16.mxu0 0
    %2598 = vmatpush1.bf16.msra.mxu0 0
    %2599 = vmatprep.subr.bf16.mxu0 0
    %2600 = vmatpush1.bf16.msra.mxu0 0
    %2601 = vmatprep.subr.bf16.mxu0 0
    %2602 = vmatpush1.bf16.msra.mxu0 0
    %2603 = vmatprep.subr.bf16.mxu0 0
    %2604 = vmatpush1.bf16.msra.mxu0 0
    %2605 = vmatprep.subr.bf16.mxu0 0
    %2606 = vmatpush1.bf16.msra.mxu0 0
    %2607 = vmatprep.subr.bf16.mxu0 0
    %2608 = vmatpush1.bf16.msra.mxu0 0
    %2609 = vmatprep.mubr.bf16.mxu0 %v2124
    %2610 = vmatmul.mubr.bf16.gmra.mrb[0].mxu0 %v219
    %v2611 = vpop.f32.mrb[0].mxu0
    %v2612 = vadd.f32 %v745, %v2611
    %v2613 = vpop.f32.mrb[0].mxu0
    %v2614 = vadd.f32 %v749, %v2613
    %v2615 = vpop.f32.mrb[0].mxu0
    %v2616 = vpop.f32.mrb[0].mxu0
    %2617 = vdwg.mxu0
    %2618 = vmatprep.subr.bf16.mxu0 %v1607
    %2619 = vmatpush1.bf16.msra.mxu0 %v1606
    %2620 = vmatprep.subr.bf16.mxu0 %v1634
    %2621 = vmatpush1.bf16.msra.mxu0 %v1633
    %2622 = vmatprep.subr.bf16.mxu0 %v1661
    %2623 = vmatpush1.bf16.msra.mxu0 %v1660
    %2624 = vmatprep.subr.bf16.mxu0 %v1688
    %2625 = vmatpush1.bf16.msra.mxu0 %v1687
    %2626 = vmatprep.subr.bf16.mxu0 %v1715
    %2627 = vmatpush1.bf16.msra.mxu0 %v1714
    %2628 = vmatprep.subr.bf16.mxu0 %v1742
    %2629 = vmatpush1.bf16.msra.mxu0 %v1741
    %2630 = vmatprep.subr.bf16.mxu0 %v1769
    %2631 = vmatpush1.bf16.msra.mxu0 %v1768
    %2632 = vmatprep.subr.bf16.mxu0 %v1796
    %2633 = vmatpush1.bf16.msra.mxu0 %v1795
    %2634 = vmatprep.subr.bf16.mxu0 %v1823
    %2635 = vmatpush1.bf16.msra.mxu0 %v1822
    %2636 = vmatprep.subr.bf16.mxu0 %v1850
    %2637 = vmatpush1.bf16.msra.mxu0 %v1849
    %2638 = vmatprep.subr.bf16.mxu0 0
    %2639 = vmatpush1.bf16.msra.mxu0 0
    %2640 = vmatprep.subr.bf16.mxu0 0
    %2641 = vmatpush1.bf16.msra.mxu0 0
    %2642 = vmatprep.subr.bf16.mxu0 0
    %2643 = vmatpush1.bf16.msra.mxu0 0
    %2644 = vmatprep.subr.bf16.mxu0 0
    %2645 = vmatpush1.bf16.msra.mxu0 0
    %2646 = vmatprep.subr.bf16.mxu0 0
    %2647 = vmatpush1.bf16.msra.mxu0 0
    %2648 = vmatprep.subr.bf16.mxu0 0
    %2649 = vmatpush1.bf16.msra.mxu0 0
    %2650 = vmatprep.mubr.bf16.mxu0 %v2124
    %2651 = vmatmul.mubr.bf16.gmra.mrb[0].mxu0 %v219
    %v2652 = vpop.f32.mrb[0].mxu0
    %v2653 = vadd.f32 %v753, %v2652
    %v2654 = vpop.f32.mrb[0].mxu0
    %v2655 = vadd.f32 %v757, %v2654
    %v2656 = vpop.f32.mrb[0].mxu0
    %v2657 = vpop.f32.mrb[0].mxu0
    %2658 = vdwg.mxu0
    %2659 = vmatprep.subr.bf16.mxu0 0
    %2660 = vmatpush1.bf16.msra.mxu0 %v1608
    %2661 = vmatprep.subr.bf16.mxu0 0
    %2662 = vmatpush1.bf16.msra.mxu0 %v1635
    %2663 = vmatprep.subr.bf16.mxu0 0
    %2664 = vmatpush1.bf16.msra.mxu0 %v1662
    %2665 = vmatprep.subr.bf16.mxu0 0
    %2666 = vmatpush1.bf16.msra.mxu0 %v1689
    %2667 = vmatprep.subr.bf16.mxu0 0
    %2668 = vmatpush1.bf16.msra.mxu0 %v1716
    %2669 = vmatprep.subr.bf16.mxu0 0
    %2670 = vmatpush1.bf16.msra.mxu0 %v1743
    %2671 = vmatprep.subr.bf16.mxu0 0
    %2672 = vmatpush1.bf16.msra.mxu0 %v1770
    %2673 = vmatprep.subr.bf16.mxu0 0
    %2674 = vmatpush1.bf16.msra.mxu0 %v1797
    %2675 = vmatprep.subr.bf16.mxu0 0
    %2676 = vmatpush1.bf16.msra.mxu0 %v1824
    %2677 = vmatprep.subr.bf16.mxu0 0
    %2678 = vmatpush1.bf16.msra.mxu0 %v1851
    %2679 = vmatprep.subr.bf16.mxu0 0
    %2680 = vmatpush1.bf16.msra.mxu0 0
    %2681 = vmatprep.subr.bf16.mxu0 0
    %2682 = vmatpush1.bf16.msra.mxu0 0
    %2683 = vmatprep.subr.bf16.mxu0 0
    %2684 = vmatpush1.bf16.msra.mxu0 0
    %2685 = vmatprep.subr.bf16.mxu0 0
    %2686 = vmatpush1.bf16.msra.mxu0 0
    %2687 = vmatprep.subr.bf16.mxu0 0
    %2688 = vmatpush1.bf16.msra.mxu0 0
    %2689 = vmatprep.subr.bf16.mxu0 0
    %2690 = vmatpush1.bf16.msra.mxu0 0
    %2691 = vmatprep.mubr.bf16.mxu0 %v2124
    %2692 = vmatmul.mubr.bf16.gmra.mrb[0].mxu0 %v219
    %v2693 = vpop.f32.mrb[0].mxu0
    %v2694 = vadd.f32 %v761, %v2693
    %v2695 = vpop.f32.mrb[0].mxu0
    %v2696 = vpop.f32.mrb[0].mxu0
    %v2697 = vpop.f32.mrb[0].mxu0
    %2698 = vdwg.mxu0
    %2699 = vst [vmem:[%s5] sm:$0xff] %v2161
    %2700 = vst [vmem:[%s5 + $0x8] sm:$0xff] %v2163
    %2701 = vst [vmem:[%s5 + $0x10] sm:$0xff] %v2202
    %2702 = vst [vmem:[%s5 + $0x18] sm:$0xff] %v2204
    %2703 = vst [vmem:[%s5 + $0x20] sm:$0xff] %v2243
    %2704 = vst [vmem:[%s5 + $0x28] sm:$0xff] %v2245
    %2705 = vst [vmem:[%s5 + $0x30] sm:$0xff] %v2284
    %2706 = vst [vmem:[%s5 + $0x38] sm:$0xff] %v2286
    %2707 = vst [vmem:[%s5 + $0x40] sm:$0xff] %v2325
    %2708 = vst [vmem:[%s5 + $0x48] sm:$0xff] %v2327
    %2709 = vst [vmem:[%s5 + $0x50] sm:$0xff] %v2366
    %2710 = vst [vmem:[%s5 + $0x58] sm:$0xff] %v2368
    %2711 = vst [vmem:[%s5 + $0x60] sm:$0xff] %v2407
    %2712 = vst [vmem:[%s5 + $0x68] sm:$0xff] %v2409
    %2713 = vst [vmem:[%s5 + $0x70] sm:$0xff] %v2448
    %2714 = vst [vmem:[%s5 + $0x78] sm:$0xff] %v2450
    %2715 = vst [vmem:[%s5 + $0x80] sm:$0xff] %v2489
    %2716 = vst [vmem:[%s5 + $0x88] sm:$0xff] %v2491
    %2717 = vst [vmem:[%s5 + $0x90] sm:$0xff] %v2530
    %2718 = vst [vmem:[%s5 + $0x98] sm:$0xff] %v2532
    %2719 = vst [vmem:[%s5 + $0xa0] sm:$0xff] %v2571
    %2720 = vst [vmem:[%s5 + $0xa8] sm:$0xff] %v2573
    %2721 = vst [vmem:[%s5 + $0xb0] sm:$0xff] %v2612
    %2722 = vst [vmem:[%s5 + $0xb8] sm:$0xff] %v2614
    %2723 = vst [vmem:[%s5 + $0xc0] sm:$0xff] %v2653
    %2724 = vst [vmem:[%s5 + $0xc8] sm:$0xff] %v2655
    %2725 = vst [vmem:[%s5 + $0xd0] sm:$0xff] %v2694
    // Predicated region
    $region34: #{_forward_impl.1} parent=1 // pred_check
      _
    $region35: #{_forward_impl.1} parent=1 // pred_check_branch
      %2727 = sbr.rel (0) target = $region37
    $region36: #{_forward_impl.1} parent=1 // pred_region
      _
    $region37: #{_forward_impl.1} parent=1 // pred_fallthru
      _
    // Predicated region
    $region38: #{_forward_impl.1} parent=1 // pred_check
      _
    $region39: #{_forward_impl.1} parent=1 // pred_check_branch
      %2729 = sbr.rel (0) target = $region41
    $region40: #{_forward_impl.1} parent=1 // pred_region
      _
    $region41: #{_forward_impl.1} parent=1 // pred_fallthru
      _
    %2730 = vsyncpa [#allocation3], 1
    %2731 = vsyncpa [#allocation5], 1

</llo_original>
